<compile_context>
chip_gen: v5e
topology: v5e:2x2
jax: 0.10.0
libtpu: 0.0.40
codegen_flags: <defaults>
</compile_context>

<pallas_src>
import math
import numpy as np
import jax
import jax.numpy as jnp
from jax.experimental import pallas as pl
from jax.experimental.pallas import tpu as pltpu  # noqa: F401 (TPU backend)

# ---------------- config (small, consistent with the module) ----------------
S = 8            # sequence length
B = 2            # batch
D_MODEL = 32     # d_model
NHEAD = 4
HEAD_DIM = D_MODEL // NHEAD
DFF = 64         # dim_feedforward (small synthetic value)
LN_EPS = 1e-5
N_TOK = S * B    # flattened token count, row n = s*B + b (no wrapper transpose)


# ------------------------------- Pallas kernel -------------------------------
def encoder_layer_kernel(x_ref, p_ref, mask_ref,
                         wqkv_ref, wo_ref, w1_ref, w2_ref, pb_ref,
                         out_ref):
    f32, bf16 = jnp.float32, jnp.bfloat16
    D = D_MODEL

    x = x_ref[...]                       # (N, D) f32, row n = s*B + b
    qk_in = x + p_ref[...]               # q = k = with_pos_embed(src, pos)

    # ---- packed parameter slab: (8, 128) f32, one vreg ----------------------
    pb = pb_ref[...]
    b_qkv = pb[0:1, 0:3 * D]             # [bq*scale | bk | bv]
    b1    = pb[1:2, 0:DFF]
    bo    = pb[2:3, 0:D]
    g1    = pb[3:4, 0:D]
    be1   = pb[4:5, 0:D]
    b2    = pb[5:6, 0:D]
    g2    = pb[6:7, 0:D]
    be2   = pb[7:8, 0:D]

    # ---- fused QKV projection: single (2N, D) @ (D, 3D) MXU pass ------------
    xin = jnp.concatenate([qk_in, x], axis=0).astype(bf16)            # (2N, D)
    qkv = jnp.dot(xin, wqkv_ref[...], preferred_element_type=f32) + b_qkv

    q = qkv[:N_TOK, 0:D]                 # already scaled by 1/sqrt(head_dim)
    k = qkv[:N_TOK, D:2 * D]
    v = qkv[N_TOK:, 2 * D:3 * D]

    def heads(t):                        # (N, D) -> (H, N, hd) bf16
        return jnp.transpose(t.reshape(N_TOK, NHEAD, HEAD_DIM),
                             (1, 0, 2)).astype(bf16)

    qh, kh, vh = heads(q), heads(k), heads(v)

    # ---- all-head scores; batch separation via precomputed additive mask ----
    scores = jnp.einsum('hqe,hke->hqk', qh, kh,
                        preferred_element_type=f32)                   # (H, N, N)
    scores = scores + mask_ref[...]                                   # bcast (N,N)

    # softmax (f32); reciprocal runs on the EUP
    m = jnp.max(scores, axis=-1, keepdims=True)
    e = jnp.exp(scores - m)
    attn = e * pl.reciprocal(jnp.sum(e, axis=-1, keepdims=True), approx=True)

    ctx = jnp.einsum('hqk,hke->hqe', attn.astype(bf16), vh,
                     preferred_element_type=f32)                      # (H, N, hd)

    # head concat (layout only) + single (N, D) @ (D, D) output projection
    ctx_cat = jnp.transpose(ctx, (1, 0, 2)).reshape(N_TOK, D).astype(bf16)
    src2 = jnp.dot(ctx_cat, wo_ref[...], preferred_element_type=f32) + bo

    # residual + LayerNorm1   (dropout1 = identity in eval)
    x1 = x + src2
    mu1 = jnp.mean(x1, axis=-1, keepdims=True)
    var1 = jnp.mean((x1 - mu1) * (x1 - mu1), axis=-1, keepdims=True)
    x1n = (x1 - mu1) * jax.lax.rsqrt(var1 + LN_EPS) * g1 + be1

    # feed-forward: linear2(relu(linear1(x)))   (dropout = identity)
    h1 = jnp.dot(x1n.astype(bf16), w1_ref[...],
                 preferred_element_type=f32) + b1
    h1 = jnp.maximum(h1, 0.0)
    ff = jnp.dot(h1.astype(bf16), w2_ref[...],
                 preferred_element_type=f32) + b2

    # residual + LayerNorm2   (dropout2 = identity in eval)
    x2 = x1n + ff
    mu2 = jnp.mean(x2, axis=-1, keepdims=True)
    var2 = jnp.mean((x2 - mu2) * (x2 - mu2), axis=-1, keepdims=True)
    out_ref[...] = (x2 - mu2) * jax.lax.rsqrt(var2 + LN_EPS) * g2 + be2


# ----------------------- one-time parameter re-layout -------------------------
def prepare_params(params):
    d, dff = D_MODEL, DFF
    scale = 1.0 / math.sqrt(HEAD_DIM)
    ipw, ipb = params["in_proj_weight"], params["in_proj_bias"]

    # (D, 3D) column-packed QKV weight; 1/sqrt(hd) folded into the Q columns.
    wqkv = jnp.concatenate(
        [ipw[:d].T * scale, ipw[d:2 * d].T, ipw[2 * d:].T],
        axis=1).astype(jnp.bfloat16)                                   # (D, 3D)
    wo = params["out_proj_weight"].T.astype(jnp.bfloat16)              # (D, D)
    w1 = params["linear1_weight"].T.astype(jnp.bfloat16)               # (D, DFF)
    w2 = params["linear2_weight"].T.astype(jnp.bfloat16)               # (DFF, D)

    # single packed bias / LayerNorm slab: (8, 128) f32 == one vreg tile
    pb = jnp.zeros((8, 128), jnp.float32)
    pb = pb.at[0, 0:3 * d].set(
        jnp.concatenate([ipb[:d] * scale, ipb[d:2 * d], ipb[2 * d:]]))
    pb = pb.at[1, 0:dff].set(params["linear1_bias"])
    pb = pb.at[2, 0:d].set(params["out_proj_bias"])
    pb = pb.at[3, 0:d].set(params["norm1_weight"])
    pb = pb.at[4, 0:d].set(params["norm1_bias"])
    pb = pb.at[5, 0:d].set(params["linear2_bias"])
    pb = pb.at[6, 0:d].set(params["norm2_weight"])
    pb = pb.at[7, 0:d].set(params["norm2_bias"])

    # additive batch mask for row layout n = s*B + b (attend within batch only)
    tok_b = np.arange(N_TOK) % B
    mask = np.where(tok_b[:, None] == tok_b[None, :], 0.0, -1e30).astype(np.float32)

    return (wqkv, wo, w1, w2, pb, jnp.asarray(mask))


# --------------------------------- wrapper -----------------------------------
@jax.jit
def transformer_encoder_layer(src_sbd, pos_sbd, prepped):
    """src_sbd, pos_sbd: (S, B, D) float32 (PyTorch MHA convention)."""
    wqkv, wo, w1, w2, pb, mask = prepped
    # pure reshapes (no transpose, no data movement): row n = s*B + b
    x = src_sbd.reshape(N_TOK, D_MODEL)
    p = pos_sbd.reshape(N_TOK, D_MODEL)

    out = pl.pallas_call(
        encoder_layer_kernel,
        out_shape=jax.ShapeDtypeStruct((N_TOK, D_MODEL), jnp.float32),
    )(x, p, mask, wqkv, wo, w1, w2, pb)

    return out.reshape(S, B, D_MODEL)


# --------------------------- pure-JAX reference -------------------------------
def reference_encoder_layer(src, pos, params):
    """src, pos: (S, B, D). Mirrors TransformerEncoderLayer.forward_post in eval."""
    d = D_MODEL
    ipw, ipb = params["in_proj_weight"], params["in_proj_bias"]
    qk = src + pos
    q = qk @ ipw[:d].T + ipb[:d]
    k = qk @ ipw[d:2 * d].T + ipb[d:2 * d]
    v = src @ ipw[2 * d:].T + ipb[2 * d:]

    def split_heads(t):  # (S,B,D) -> (B, H, S, hd)
        return jnp.transpose(t.reshape(S, B, NHEAD, HEAD_DIM), (1, 2, 0, 3))

    qh, kh, vh = split_heads(q), split_heads(k), split_heads(v)
    scores = jnp.einsum("bhqd,bhkd->bhqk", qh, kh) / math.sqrt(HEAD_DIM)
    attn = jax.nn.softmax(scores, axis=-1)
    ctx = jnp.einsum("bhqk,bhkd->bhqd", attn, vh)        # (B,H,S,hd)
    ctx = jnp.transpose(ctx, (2, 0, 1, 3)).reshape(S, B, d)
    src2 = ctx @ params["out_proj_weight"].T + params["out_proj_bias"]

    def ln(x, g, b):
        mu = jnp.mean(x, axis=-1, keepdims=True)
        var = jnp.mean((x - mu) ** 2, axis=-1, keepdims=True)
        return (x - mu) / jnp.sqrt(var + LN_EPS) * g + b

    x = ln(src + src2, params["norm1_weight"], params["norm1_bias"])
    ff = jax.nn.relu(x @ params["linear1_weight"].T + params["linear1_bias"])
    ff = ff @ params["linear2_weight"].T + params["linear2_bias"]
    return ln(x + ff, params["norm2_weight"], params["norm2_bias"])


# ----------------------------------- main -------------------------------------
if __name__ == "__main__":
    key = jax.random.PRNGKey(0)
    ks = jax.random.split(key, 12)

    params = {
        "in_proj_weight": 0.1 * jax.random.normal(ks[0], (3 * D_MODEL, D_MODEL), jnp.float32),
        "in_proj_bias":   0.01 * jax.random.normal(ks[1], (3 * D_MODEL,), jnp.float32),
        "out_proj_weight": 0.1 * jax.random.normal(ks[2], (D_MODEL, D_MODEL), jnp.float32),
        "out_proj_bias":   0.01 * jax.random.normal(ks[3], (D_MODEL,), jnp.float32),
        "linear1_weight":  0.1 * jax.random.normal(ks[4], (DFF, D_MODEL), jnp.float32),
        "linear1_bias":    0.01 * jax.random.normal(ks[5], (DFF,), jnp.float32),
        "linear2_weight":  0.1 * jax.random.normal(ks[6], (D_MODEL, DFF), jnp.float32),
        "linear2_bias":    0.01 * jax.random.normal(ks[7], (D_MODEL,), jnp.float32),
        "norm1_weight": jnp.ones((D_MODEL,), jnp.float32),
        "norm1_bias":   jnp.zeros((D_MODEL,), jnp.float32),
        "norm2_weight": jnp.ones((D_MODEL,), jnp.float32),
        "norm2_bias":   jnp.zeros((D_MODEL,), jnp.float32),
    }

    src = jax.random.normal(ks[8], (S, B, D_MODEL), jnp.float32)
    pos = jax.random.normal(ks[9], (S, B, D_MODEL), jnp.float32)

    prepped = prepare_params(params)           # one-time weight re-layout (hoisted)
    out = transformer_encoder_layer(src, pos, prepped)
    out = jax.block_until_ready(out)

    ref = reference_encoder_layer(src, pos, params)
    assert out.shape == (S, B, D_MODEL)
    # bf16 matmul operands + approx reciprocal => slightly looser tolerance vs f32 ref
    assert jnp.allclose(out, ref, atol=2e-2, rtol=2e-2), "mismatch vs reference"

    print("KERNEL_OK")
</pallas_src>

<mosaic_0001>
module attributes {stable_mosaic.version = 11 : i64} {
  func.func @encoder_layer_kernel(%arg0: memref<16x32xf32, #tpu.memory_space<vmem>>, %arg1: memref<16x32xf32, #tpu.memory_space<vmem>>, %arg2: memref<16x16xf32, #tpu.memory_space<vmem>>, %arg3: memref<32x96xbf16, #tpu.memory_space<vmem>>, %arg4: memref<32x32xbf16, #tpu.memory_space<vmem>>, %arg5: memref<32x64xbf16, #tpu.memory_space<vmem>>, %arg6: memref<64x32xbf16, #tpu.memory_space<vmem>>, %arg7: memref<8x128xf32, #tpu.memory_space<vmem>>, %arg8: memref<16x32xf32, #tpu.memory_space<vmem>>) attributes {dimension_semantics = [], scalar_prefetch = 0 : i64, scratch_operands = 0 : i64, tpu.core_type = #tpu.core_type<tc>} {
    %c0 = arith.constant 0 : index
    %c0_0 = arith.constant 0 : index
    %0 = vector.load %arg0[%c0, %c0_0] : memref<16x32xf32, #tpu.memory_space<vmem>>, vector<16x32xf32>
    %c0_1 = arith.constant 0 : index
    %c0_2 = arith.constant 0 : index
    %1 = vector.load %arg1[%c0_1, %c0_2] : memref<16x32xf32, #tpu.memory_space<vmem>>, vector<16x32xf32>
    %2 = arith.addf %0, %1 : vector<16x32xf32>
    %c0_3 = arith.constant 0 : index
    %c0_4 = arith.constant 0 : index
    %3 = vector.load %arg7[%c0_3, %c0_4] : memref<8x128xf32, #tpu.memory_space<vmem>>, vector<8x128xf32>
    %4 = vector.extract_strided_slice %3 {offsets = [0, 0], sizes = [1, 96], strides = [1, 1]} : vector<8x128xf32> to vector<1x96xf32>
    %5 = vector.extract_strided_slice %3 {offsets = [1, 0], sizes = [1, 64], strides = [1, 1]} : vector<8x128xf32> to vector<1x64xf32>
    %6 = vector.extract_strided_slice %3 {offsets = [2, 0], sizes = [1, 32], strides = [1, 1]} : vector<8x128xf32> to vector<1x32xf32>
    %7 = vector.extract_strided_slice %3 {offsets = [3, 0], sizes = [1, 32], strides = [1, 1]} : vector<8x128xf32> to vector<1x32xf32>
    %8 = vector.extract_strided_slice %3 {offsets = [4, 0], sizes = [1, 32], strides = [1, 1]} : vector<8x128xf32> to vector<1x32xf32>
    %9 = vector.extract_strided_slice %3 {offsets = [5, 0], sizes = [1, 32], strides = [1, 1]} : vector<8x128xf32> to vector<1x32xf32>
    %10 = vector.extract_strided_slice %3 {offsets = [6, 0], sizes = [1, 32], strides = [1, 1]} : vector<8x128xf32> to vector<1x32xf32>
    %11 = vector.extract_strided_slice %3 {offsets = [7, 0], sizes = [1, 32], strides = [1, 1]} : vector<8x128xf32> to vector<1x32xf32>
    %12 = tpu.concatenate %2, %0 in 0 : vector<16x32xf32>, vector<16x32xf32> -> vector<32x32xf32>
    %13 = arith.truncf %12 : vector<32x32xf32> to vector<32x32xbf16>
    %c0_5 = arith.constant 0 : index
    %c0_6 = arith.constant 0 : index
    %14 = vector.load %arg3[%c0_5, %c0_6] : memref<32x96xbf16, #tpu.memory_space<vmem>>, vector<32x96xbf16>
    %cst = arith.constant dense<0.000000e+00> : vector<32x96xf32>
    %15 = tpu.matmul %13, %14, %cst {dimension_numbers = #tpu.dot_dimension_numbers<[1], [0], [0], [1], [0, 0, 1, 1], [], []>} : vector<32x32xbf16>, vector<32x96xbf16>, vector<32x96xf32> -> vector<32x96xf32>
    %16 = vector.broadcast %4 : vector<1x96xf32> to vector<32x96xf32>
    %17 = arith.addf %15, %16 : vector<32x96xf32>
    %18 = vector.extract_strided_slice %17 {offsets = [0, 0], sizes = [16, 32], strides = [1, 1]} : vector<32x96xf32> to vector<16x32xf32>
    %19 = vector.extract_strided_slice %17 {offsets = [0, 32], sizes = [16, 32], strides = [1, 1]} : vector<32x96xf32> to vector<16x32xf32>
    %20 = vector.extract_strided_slice %17 {offsets = [16, 64], sizes = [16, 32], strides = [1, 1]} : vector<32x96xf32> to vector<16x32xf32>
    %21 = vector.shape_cast %18 : vector<16x32xf32> to vector<16x4x8xf32>
    %22 = tpu.transpose %21, [1, 0, 2] : vector<16x4x8xf32> -> vector<4x16x8xf32>
    %23 = arith.truncf %22 : vector<4x16x8xf32> to vector<4x16x8xbf16>
    %24 = vector.shape_cast %19 : vector<16x32xf32> to vector<16x4x8xf32>
    %25 = tpu.transpose %24, [1, 0, 2] : vector<16x4x8xf32> -> vector<4x16x8xf32>
    %26 = arith.truncf %25 : vector<4x16x8xf32> to vector<4x16x8xbf16>
    %27 = vector.shape_cast %20 : vector<16x32xf32> to vector<16x4x8xf32>
    %28 = tpu.transpose %27, [1, 0, 2] : vector<16x4x8xf32> -> vector<4x16x8xf32>
    %29 = arith.truncf %28 : vector<4x16x8xf32> to vector<4x16x8xbf16>
    "tpu.trace_start"() <{level = 10 : i32, message = "hqe,hke->hqk"}> : () -> ()
    %cst_7 = arith.constant dense<0.000000e+00> : vector<4x16x16xf32>
    %30 = tpu.matmul %23, %26, %cst_7 {dimension_numbers = #tpu.dot_dimension_numbers<[2], [2], [1], [1], [0, 0, 0, 1, 1, 1], [0], [0]>} : vector<4x16x8xbf16>, vector<4x16x8xbf16>, vector<4x16x16xf32> -> vector<4x16x16xf32>
    "tpu.trace_stop"() : () -> ()
    %c0_8 = arith.constant 0 : index
    %c0_9 = arith.constant 0 : index
    %31 = vector.load %arg2[%c0_8, %c0_9] : memref<16x16xf32, #tpu.memory_space<vmem>>, vector<16x16xf32>
    %32 = vector.shape_cast %31 : vector<16x16xf32> to vector<1x16x16xf32>
    %33 = vector.broadcast %32 : vector<1x16x16xf32> to vector<4x16x16xf32>
    %34 = arith.addf %30, %33 : vector<4x16x16xf32>
    %cst_10 = arith.constant dense<0xFF800000> : vector<4x16xf32>
    %35 = vector.multi_reduction <maximumf>, %34, %cst_10 [2] : vector<4x16x16xf32> to vector<4x16xf32>
    %36 = vector.shape_cast %35 : vector<4x16xf32> to vector<4x16x1xf32>
    %37 = vector.broadcast %36 : vector<4x16x1xf32> to vector<4x16x16xf32>
    %38 = arith.subf %34, %37 : vector<4x16x16xf32>
    %39 = math.exp %38 : vector<4x16x16xf32>
    %cst_11 = arith.constant dense<0.000000e+00> : vector<4x16xf32>
    %40 = vector.multi_reduction <add>, %39, %cst_11 [2] : vector<4x16x16xf32> to vector<4x16xf32>
    %41 = vector.shape_cast %40 : vector<4x16xf32> to vector<4x16x1xf32>
    %42 = tpu.reciprocal %41 {approx = true} : vector<4x16x1xf32> -> vector<4x16x1xf32>
    %43 = vector.broadcast %42 : vector<4x16x1xf32> to vector<4x16x16xf32>
    %44 = arith.mulf %39, %43 : vector<4x16x16xf32>
    %45 = arith.truncf %44 : vector<4x16x16xf32> to vector<4x16x16xbf16>
    "tpu.trace_start"() <{level = 10 : i32, message = "hqk,hke->hqe"}> : () -> ()
    %cst_12 = arith.constant dense<0.000000e+00> : vector<4x16x8xf32>
    %46 = tpu.matmul %45, %29, %cst_12 {dimension_numbers = #tpu.dot_dimension_numbers<[2], [1], [1], [2], [0, 0, 0, 1, 1, 2], [0], [0]>} : vector<4x16x16xbf16>, vector<4x16x8xbf16>, vector<4x16x8xf32> -> vector<4x16x8xf32>
    "tpu.trace_stop"() : () -> ()
    %47 = tpu.transpose %46, [1, 0, 2] : vector<4x16x8xf32> -> vector<16x4x8xf32>
    %48 = vector.shape_cast %47 : vector<16x4x8xf32> to vector<16x32xf32>
    %49 = arith.truncf %48 : vector<16x32xf32> to vector<16x32xbf16>
    %c0_13 = arith.constant 0 : index
    %c0_14 = arith.constant 0 : index
    %50 = vector.load %arg4[%c0_13, %c0_14] : memref<32x32xbf16, #tpu.memory_space<vmem>>, vector<32x32xbf16>
    %cst_15 = arith.constant dense<0.000000e+00> : vector<16x32xf32>
    %51 = tpu.matmul %49, %50, %cst_15 {dimension_numbers = #tpu.dot_dimension_numbers<[1], [0], [0], [1], [0, 0, 1, 1], [], []>} : vector<16x32xbf16>, vector<32x32xbf16>, vector<16x32xf32> -> vector<16x32xf32>
    %52 = vector.broadcast %6 : vector<1x32xf32> to vector<16x32xf32>
    %53 = arith.addf %51, %52 : vector<16x32xf32>
    %54 = arith.addf %0, %53 : vector<16x32xf32>
    %cst_16 = arith.constant dense<0.000000e+00> : vector<16xf32>
    %55 = vector.multi_reduction <add>, %54, %cst_16 [1] : vector<16x32xf32> to vector<16xf32>
    %56 = vector.shape_cast %55 : vector<16xf32> to vector<16x1xf32>
    %cst_17 = arith.constant 3.200000e+01 : f32
    %57 = vector.broadcast %cst_17 : f32 to vector<16x1xf32>
    %58 = arith.divf %56, %57 : vector<16x1xf32>
    %59 = vector.broadcast %58 : vector<16x1xf32> to vector<16x32xf32>
    %60 = arith.subf %54, %59 : vector<16x32xf32>
    %61 = vector.broadcast %58 : vector<16x1xf32> to vector<16x32xf32>
    %62 = arith.subf %54, %61 : vector<16x32xf32>
    %63 = arith.mulf %60, %62 : vector<16x32xf32>
    %cst_18 = arith.constant dense<0.000000e+00> : vector<16xf32>
    %64 = vector.multi_reduction <add>, %63, %cst_18 [1] : vector<16x32xf32> to vector<16xf32>
    %65 = vector.shape_cast %64 : vector<16xf32> to vector<16x1xf32>
    %cst_19 = arith.constant 3.200000e+01 : f32
    %66 = vector.broadcast %cst_19 : f32 to vector<16x1xf32>
    %67 = arith.divf %65, %66 : vector<16x1xf32>
    %68 = vector.broadcast %58 : vector<16x1xf32> to vector<16x32xf32>
    %69 = arith.subf %54, %68 : vector<16x32xf32>
    %cst_20 = arith.constant 9.99999974E-6 : f32
    %70 = vector.broadcast %cst_20 : f32 to vector<16x1xf32>
    %71 = arith.addf %67, %70 : vector<16x1xf32>
    %72 = math.rsqrt %71 : vector<16x1xf32>
    %73 = vector.broadcast %72 : vector<16x1xf32> to vector<16x32xf32>
    %74 = arith.mulf %69, %73 : vector<16x32xf32>
    %75 = vector.broadcast %7 : vector<1x32xf32> to vector<16x32xf32>
    %76 = arith.mulf %74, %75 : vector<16x32xf32>
    %77 = vector.broadcast %8 : vector<1x32xf32> to vector<16x32xf32>
    %78 = arith.addf %76, %77 : vector<16x32xf32>
    %79 = arith.truncf %78 : vector<16x32xf32> to vector<16x32xbf16>
    %c0_21 = arith.constant 0 : index
    %c0_22 = arith.constant 0 : index
    %80 = vector.load %arg5[%c0_21, %c0_22] : memref<32x64xbf16, #tpu.memory_space<vmem>>, vector<32x64xbf16>
    %cst_23 = arith.constant dense<0.000000e+00> : vector<16x64xf32>
    %81 = tpu.matmul %79, %80, %cst_23 {dimension_numbers = #tpu.dot_dimension_numbers<[1], [0], [0], [1], [0, 0, 1, 1], [], []>} : vector<16x32xbf16>, vector<32x64xbf16>, vector<16x64xf32> -> vector<16x64xf32>
    %82 = vector.broadcast %5 : vector<1x64xf32> to vector<16x64xf32>
    %83 = arith.addf %81, %82 : vector<16x64xf32>
    %cst_24 = arith.constant 0.000000e+00 : f32
    %84 = vector.broadcast %cst_24 : f32 to vector<16x64xf32>
    %85 = arith.maximumf %83, %84 : vector<16x64xf32>
    %86 = arith.truncf %85 : vector<16x64xf32> to vector<16x64xbf16>
    %c0_25 = arith.constant 0 : index
    %c0_26 = arith.constant 0 : index
    %87 = vector.load %arg6[%c0_25, %c0_26] : memref<64x32xbf16, #tpu.memory_space<vmem>>, vector<64x32xbf16>
    %cst_27 = arith.constant dense<0.000000e+00> : vector<16x32xf32>
    %88 = tpu.matmul %86, %87, %cst_27 {dimension_numbers = #tpu.dot_dimension_numbers<[1], [0], [0], [1], [0, 0, 1, 1], [], []>} : vector<16x64xbf16>, vector<64x32xbf16>, vector<16x32xf32> -> vector<16x32xf32>
    %89 = vector.broadcast %9 : vector<1x32xf32> to vector<16x32xf32>
    %90 = arith.addf %88, %89 : vector<16x32xf32>
    %91 = arith.addf %78, %90 : vector<16x32xf32>
    %cst_28 = arith.constant dense<0.000000e+00> : vector<16xf32>
    %92 = vector.multi_reduction <add>, %91, %cst_28 [1] : vector<16x32xf32> to vector<16xf32>
    %93 = vector.shape_cast %92 : vector<16xf32> to vector<16x1xf32>
    %cst_29 = arith.constant 3.200000e+01 : f32
    %94 = vector.broadcast %cst_29 : f32 to vector<16x1xf32>
    %95 = arith.divf %93, %94 : vector<16x1xf32>
    %96 = vector.broadcast %95 : vector<16x1xf32> to vector<16x32xf32>
    %97 = arith.subf %91, %96 : vector<16x32xf32>
    %98 = vector.broadcast %95 : vector<16x1xf32> to vector<16x32xf32>
    %99 = arith.subf %91, %98 : vector<16x32xf32>
    %100 = arith.mulf %97, %99 : vector<16x32xf32>
    %cst_30 = arith.constant dense<0.000000e+00> : vector<16xf32>
    %101 = vector.multi_reduction <add>, %100, %cst_30 [1] : vector<16x32xf32> to vector<16xf32>
    %102 = vector.shape_cast %101 : vector<16xf32> to vector<16x1xf32>
    %cst_31 = arith.constant 3.200000e+01 : f32
    %103 = vector.broadcast %cst_31 : f32 to vector<16x1xf32>
    %104 = arith.divf %102, %103 : vector<16x1xf32>
    %105 = vector.broadcast %95 : vector<16x1xf32> to vector<16x32xf32>
    %106 = arith.subf %91, %105 : vector<16x32xf32>
    %cst_32 = arith.constant 9.99999974E-6 : f32
    %107 = vector.broadcast %cst_32 : f32 to vector<16x1xf32>
    %108 = arith.addf %104, %107 : vector<16x1xf32>
    %109 = math.rsqrt %108 : vector<16x1xf32>
    %110 = vector.broadcast %109 : vector<16x1xf32> to vector<16x32xf32>
    %111 = arith.mulf %106, %110 : vector<16x32xf32>
    %112 = vector.broadcast %10 : vector<1x32xf32> to vector<16x32xf32>
    %113 = arith.mulf %111, %112 : vector<16x32xf32>
    %114 = vector.broadcast %11 : vector<1x32xf32> to vector<16x32xf32>
    %115 = arith.addf %113, %114 : vector<16x32xf32>
    %c0_33 = arith.constant 0 : index
    %c0_34 = arith.constant 0 : index
    %116 = vector.load %arg8[%c0_33, %c0_34] : memref<16x32xf32, #tpu.memory_space<vmem>>, vector<16x32xf32>
    tpu.vector_store %arg8[%c0_33, %c0_34], %115 {strides = array<i32>} : memref<16x32xf32, #tpu.memory_space<vmem>>, vector<16x32xf32>,
    return
  }
}

</mosaic_0001>

<llo_original>
// kernel: transformer_encoder_layer.1
$region0: #{transformer_encoder_layer.1}
  #allocation0 [shape = 'u32[]', space=smem, size = 0x4, offset = 0x4, fixed_abs, tag = 'smem constant byte address 0x4 - core index']
  #allocation1 [shape = 'u32[72,128]{1,0:T(1,128)}', space=vmem, size = 0x9000, scoped, tag = 'internal scratch']
  %s0 = inlined_call_operand.vmem [shape: f32[16,32], index: 0, kind: input, shape index: {}]
  %s1 = inlined_call_operand.vmem [shape: f32[16,32], index: 1, kind: input, shape index: {}]
  %s2 = inlined_call_operand.vmem [shape: f32[16,16], index: 2, kind: input, shape index: {}]
  %s3 = inlined_call_operand.hbm [shape: bf16[32,96], index: 3, kind: input, shape index: {}]
  %s4 = inlined_call_operand.hbm [shape: bf16[32,32], index: 4, kind: input, shape index: {}]
  %s5 = inlined_call_operand.hbm [shape: bf16[32,64], index: 5, kind: input, shape index: {}]
  %s6 = inlined_call_operand.vmem [shape: bf16[64,32], index: 6, kind: input, shape index: {}]
  %s7 = inlined_call_operand.hbm [shape: f32[8,128], index: 7, kind: input, shape index: {}]
  %s8 = inlined_call_operand.hbm [shape: f32[16,32], index: 8, kind: output, shape index: {}]
  %s9 = sld [smem:[#allocation0]]
  $region58: #{transformer_encoder_layer.1} parent=0
    _
  %s11 = ssub.s32 1, %s9
  %s12 = scalar_select 0, %s11, %s9
  $region1: #{transformer_encoder_layer.1} parent=0
    #allocation2 [shape = 'u8[8192]{0}', space=vmem, size = 0x2000, scoped, tag = 'input window, operand 3, single buffered']
    #allocation3 [shape = 's32[1]{0}', space=sflag, size = 0x4, scoped, tag = 'scoped memory for transformer_encoder_layer.1']
    #allocation4 [shape = 's32[1]{0}', space=sflag, size = 0x4, scoped, tag = 'scoped memory for transformer_encoder_layer.1']
    #allocation5 [shape = 'u8[8192]{0}', space=vmem, size = 0x2000, scoped, tag = 'input window, operand 4, single buffered']
    #allocation6 [shape = 's32[1]{0}', space=sflag, size = 0x4, scoped, tag = 'scoped memory for transformer_encoder_layer.1']
    #allocation7 [shape = 'u8[8192]{0}', space=vmem, size = 0x2000, scoped, tag = 'input window, operand 5, single buffered']
    #allocation8 [shape = 'u8[4096]{0}', space=vmem, size = 0x1000, scoped, tag = 'input window, operand 7, single buffered']
    #allocation9 [shape = 's32[1]{0}', space=sflag, size = 0x4, scoped, tag = 'scoped memory for transformer_encoder_layer.1']
    #allocation10 [shape = 'u8[8192]{0}', space=vmem, size = 0x2000, scoped, tag = 'output window, operand 0, single buffered']
    %13 = vsyncpa [#allocation3], 0
    %14 = vsyncpa [#allocation6], 0
    %15 = vsyncpa [#allocation9], 0
    %16 = vsyncpa [#allocation4], 0
    // Predicated region
    $region2: #{transformer_encoder_layer.1} parent=1 // pred_check
      _
    $region3: #{transformer_encoder_layer.1} parent=1 // pred_check_branch
      %18 = sbr.rel (0) target = $region5
    $region4: #{transformer_encoder_layer.1} parent=1 // pred_region
      _
    $region5: #{transformer_encoder_layer.1} parent=1 // pred_fallthru
      _
    // Predicated region
    $region6: #{transformer_encoder_layer.1} parent=1 // pred_check
      _
    $region7: #{transformer_encoder_layer.1} parent=1 // pred_check_branch
      %20 = sbr.rel (0) target = $region9
    $region8: #{transformer_encoder_layer.1} parent=1 // pred_region
      _
    $region9: #{transformer_encoder_layer.1} parent=1 // pred_fallthru
      _
    // Predicated region
    $region10: #{transformer_encoder_layer.1} parent=1 // pred_check
      _
    $region11: #{transformer_encoder_layer.1} parent=1 // pred_check_branch
      %22 = sbr.rel (0) target = $region13
    $region12: #{transformer_encoder_layer.1} parent=1 // pred_region
      _
    $region13: #{transformer_encoder_layer.1} parent=1 // pred_fallthru
      _
    // Predicated region
    $region14: #{transformer_encoder_layer.1} parent=1 // pred_check
      _
    $region15: #{transformer_encoder_layer.1} parent=1 // pred_check_branch
      %24 = sbr.rel (0) target = $region17
    $region16: #{transformer_encoder_layer.1} parent=1 // pred_region
      %26 = vsyncadd [#allocation3], 0
      %s27 = sshll.u32 %s3, 4
      %s28 = int_to_ptr.hbm [resolvable:$true] %s27
      %s29 = sshll.u32 [#allocation2], 4
      %s30 = int_to_ptr.vmem [resolvable:$true] %s29
      %35 = dma.hbm_to_vmem [thread:$0]  %s28, 256, %s30, [#allocation3], 64, 64, 4
    $region17: #{transformer_encoder_layer.1} parent=1 // pred_fallthru
      _
    // Predicated region
    $region18: #{transformer_encoder_layer.1} parent=1 // pred_check
      _
    $region19: #{transformer_encoder_layer.1} parent=1 // pred_check_branch
      %37 = sbr.rel (0) target = $region21
    $region20: #{transformer_encoder_layer.1} parent=1 // pred_region
      %39 = vsyncadd [#allocation6], 0
      %s40 = sshll.u32 %s4, 4
      %s41 = int_to_ptr.hbm [resolvable:$true] %s40
      %s42 = sshll.u32 [#allocation5], 4
      %s43 = int_to_ptr.vmem [resolvable:$true] %s42
      %48 = dma.hbm_to_vmem [thread:$0]  %s41, 256, %s43, [#allocation6], 64, 64, 4
    $region21: #{transformer_encoder_layer.1} parent=1 // pred_fallthru
      _
    // Predicated region
    $region22: #{transformer_encoder_layer.1} parent=1 // pred_check
      _
    $region23: #{transformer_encoder_layer.1} parent=1 // pred_check_branch
      %50 = sbr.rel (0) target = $region25
    $region24: #{transformer_encoder_layer.1} parent=1 // pred_region
      %52 = vsyncadd [#allocation6], 0
      %s53 = sshll.u32 %s5, 4
      %s54 = int_to_ptr.hbm [resolvable:$true] %s53
      %s55 = sshll.u32 [#allocation7], 4
      %s56 = int_to_ptr.vmem [resolvable:$true] %s55
      %61 = dma.hbm_to_vmem [thread:$0]  %s54, 256, %s56, [#allocation6], 64, 64, 4
    $region25: #{transformer_encoder_layer.1} parent=1 // pred_fallthru
      _
    // Predicated region
    $region26: #{transformer_encoder_layer.1} parent=1 // pred_check
      _
    $region27: #{transformer_encoder_layer.1} parent=1 // pred_check_branch
      %63 = sbr.rel (0) target = $region29
    $region28: #{transformer_encoder_layer.1} parent=1 // pred_region
      _
    $region29: #{transformer_encoder_layer.1} parent=1 // pred_fallthru
      _
    // Predicated region
    $region30: #{transformer_encoder_layer.1} parent=1 // pred_check
      _
    $region31: #{transformer_encoder_layer.1} parent=1 // pred_check_branch
      %65 = sbr.rel (0) target = $region33
    $region32: #{transformer_encoder_layer.1} parent=1 // pred_region
      %67 = vsyncadd [#allocation9], 0
      %s69 = sshll.u32 %s7, 4
      %s70 = int_to_ptr.hbm [resolvable:$true] %s69
      %s71 = sshll.u32 [#allocation8], 4
      %s72 = int_to_ptr.vmem [resolvable:$true] %s71
      %74 = dma.hbm_to_vmem [thread:$0]  %s70, 128, %s72, [#allocation9]
    $region33: #{transformer_encoder_layer.1} parent=1 // pred_fallthru
      _
    // Predicated region
    $region34: #{transformer_encoder_layer.1} parent=1 // pred_check
      _
    $region35: #{transformer_encoder_layer.1} parent=1 // pred_check_branch
      %76 = sbr.rel (0) target = $region37
    $region36: #{transformer_encoder_layer.1} parent=1 // pred_region
      %78 = dma.done [#allocation3], 256
    $region37: #{transformer_encoder_layer.1} parent=1 // pred_fallthru
      _
    // Predicated region
    $region38: #{transformer_encoder_layer.1} parent=1 // pred_check
      _
    $region39: #{transformer_encoder_layer.1} parent=1 // pred_check_branch
      %80 = sbr.rel (0) target = $region41
    $region40: #{transformer_encoder_layer.1} parent=1 // pred_region
      %82 = dma.done [#allocation6], 256
    $region41: #{transformer_encoder_layer.1} parent=1 // pred_fallthru
      _
    // Predicated region
    $region42: #{transformer_encoder_layer.1} parent=1 // pred_check
      _
    $region43: #{transformer_encoder_layer.1} parent=1 // pred_check_branch
      %84 = sbr.rel (0) target = $region45
    $region44: #{transformer_encoder_layer.1} parent=1 // pred_region
      %86 = dma.done [#allocation6], 256
    $region45: #{transformer_encoder_layer.1} parent=1 // pred_fallthru
      _
    // Predicated region
    $region46: #{transformer_encoder_layer.1} parent=1 // pred_check
      _
    $region47: #{transformer_encoder_layer.1} parent=1 // pred_check_branch
      %88 = sbr.rel (0) target = $region49
    $region48: #{transformer_encoder_layer.1} parent=1 // pred_region
      %90 = dma.done [#allocation9], 128
    $region49: #{transformer_encoder_layer.1} parent=1 // pred_fallthru
      _
    %v92 = vld [vmem:[%s0] sm:$0xff]
    %v93 = vld [vmem:[%s0 + $0x8] sm:$0xff]
    %v94 = vld [vmem:[%s1] sm:$0xff]
    %v95 = vld [vmem:[%s1 + $0x8] sm:$0xff]
    %v96 = vadd.f32 %v92, %v94
    %v97 = vadd.f32 %v93, %v95
    %v98 = vld [vmem:[#allocation8] sm:$0xff]
    %v99 = vpack.c.bf16 %v97, %v96
    %v100 = vpack.c.bf16 %v93, %v92
    %v101 = vld [vmem:[#allocation2] sm:$0xf]
    %v102 = vld [vmem:[#allocation2 + $0x4] sm:$0xf]
    %v103 = vld [vmem:[#allocation2 + $0x8] sm:$0xf]
    %v104 = vld [vmem:[#allocation2 + $0xc] sm:$0xf]
    %v105 = vperm.slane %v98, 0
    %v110 = vunpack.c.l.b16 %v101
    %v111 = vunpack.c.l.b16 %v102
    %v112 = vunpack.c.l.b16 %v103
    %v113 = vunpack.c.l.b16 %v104
    %v114 = vpack.c.b16 %v111, %v110
    %v115 = vpack.c.b16 %v113, %v112
    %vm118 = vcmask 261120
    %v120 = vsel %vm118, %v99, 0
    %v123 = vsel %vm118, %v100, 0
    %125 = vmatpush.bf16.msra.mxu0 0
    %126 = vmatpush.bf16.msra.mxu0 0
    %127 = vmatpush.bf16.msra.mxu0 0
    %128 = vmatpush.bf16.msra.mxu0 0
    %129 = vmatpush.bf16.msra.mxu0 0
    %130 = vmatpush.bf16.msra.mxu0 0
    %131 = vmatpush.bf16.msra.mxu0 %v115
    %132 = vmatpush.bf16.msra.mxu0 %v114
    %133 = vmatmul.bf16.gmra.mxu0 %v120
    %v134 = vpop.f32.mrf.mxu0
    %v135 = vadd.f32 %v105, %v134
    %v136 = vpop.f32.mrf.mxu0
    %v137 = vadd.f32 %v105, %v136
    %138 = vmatmul.bf16.gmra.mxu0 %v123
    %v139 = vpop.f32.mrf.mxu0
    %v140 = vadd.f32 %v105, %v139
    %v141 = vpop.f32.mrf.mxu0
    %v142 = vadd.f32 %v105, %v141
    %143 = vdwg.mxu0
    %146 = vrot.lane.b32.xlu0 %v135, 120
    %v147 = vpop.permute.xlu0 %146
    %148 = vrot.lane.b32.xlu0 %v137, 120
    %v149 = vpop.permute.xlu0 %148
    %152 = vrot.lane.b32.xlu0 %v135, 112
    %v153 = vpop.permute.xlu0 %152
    %154 = vrot.lane.b32.xlu0 %v137, 112
    %v155 = vpop.permute.xlu0 %154
    %158 = vrot.lane.b32.xlu0 %v135, 104
    %v159 = vpop.permute.xlu0 %158
    %160 = vrot.lane.b32.xlu0 %v137, 104
    %v161 = vpop.permute.xlu0 %160
    %v164 = vrot.slane %v153, 4
    %vm165 = vcmask 1047556
    %v166 = vsel %vm165, %v164, %v135
    %v167 = vrot.slane %v135, 4
    %v168 = vsel %vm165, %v153, %v167
    %v170 = vunpack.c.l.s4 1983009808
    %v171 = vunpack.c.0.s8 %v170
    %v172 = vperm.slane %v166, %v171
    %v174 = vunpack.c.l.s4 1983009808
    %v175 = vunpack.c.0.s8 %v174
    %v176 = vperm.slane %v168, %v175
    %v177 = vrot.slane %v159, 4
    %v178 = vsel %vm165, %v177, %v147
    %v179 = vrot.slane %v147, 4
    %v180 = vsel %vm165, %v159, %v179
    %v182 = vunpack.c.l.s4 1983009808
    %v183 = vunpack.c.0.s8 %v182
    %v184 = vperm.slane %v178, %v183
    %v186 = vunpack.c.l.s4 1983009808
    %v187 = vunpack.c.0.s8 %v186
    %v188 = vperm.slane %v180, %v187
    %v189 = vrot.slane %v184, 4
    %v190 = vsel %vm165, %v189, %v172
    %v191 = vrot.slane %v172, 4
    %v192 = vsel %vm165, %v184, %v191
    %v194 = vunpack.c.l.s4 1934713408
    %v195 = vunpack.c.0.s8 %v194
    %v196 = vperm.slane %v190, %v195
    %v198 = vunpack.c.l.s4 1934713408
    %v199 = vunpack.c.0.s8 %v198
    %v200 = vperm.slane %v192, %v199
    %v201 = vrot.slane %v188, 4
    %v202 = vsel %vm165, %v201, %v176
    %v203 = vrot.slane %v176, 4
    %v204 = vsel %vm165, %v188, %v203
    %v206 = vunpack.c.l.s4 1934713408
    %v207 = vunpack.c.0.s8 %v206
    %v208 = vperm.slane %v202, %v207
    %v210 = vunpack.c.l.s4 1934713408
    %v211 = vunpack.c.0.s8 %v210
    %v212 = vperm.slane %v204, %v211
    %v213 = vrot.slane %v196, 4
    %v214 = vsel %vm165, 0.0, %v213
    %v215 = vrot.slane %v200, 4
    %v216 = vsel %vm165, 0.0, %v215
    %v217 = vrot.slane %v208, 4
    %v218 = vsel %vm165, 0.0, %v217
    %v219 = vrot.slane %v212, 4
    %v220 = vsel %vm165, 0.0, %v219
    %v221 = vrot.slane %v155, 4
    %v222 = vsel %vm165, %v221, %v137
    %v223 = vrot.slane %v137, 4
    %v224 = vsel %vm165, %v155, %v223
    %v226 = vunpack.c.l.s4 1983009808
    %v227 = vunpack.c.0.s8 %v226
    %v228 = vperm.slane %v222, %v227
    %v230 = vunpack.c.l.s4 1983009808
    %v231 = vunpack.c.0.s8 %v230
    %v232 = vperm.slane %v224, %v231
    %v233 = vrot.slane %v161, 4
    %v234 = vsel %vm165, %v233, %v149
    %v235 = vrot.slane %v149, 4
    %v236 = vsel %vm165, %v161, %v235
    %v238 = vunpack.c.l.s4 1983009808
    %v239 = vunpack.c.0.s8 %v238
    %v240 = vperm.slane %v234, %v239
    %v242 = vunpack.c.l.s4 1983009808
    %v243 = vunpack.c.0.s8 %v242
    %v244 = vperm.slane %v236, %v243
    %v245 = vrot.slane %v240, 4
    %v246 = vsel %vm165, %v245, %v228
    %v247 = vrot.slane %v228, 4
    %v248 = vsel %vm165, %v240, %v247
    %v250 = vunpack.c.l.s4 1934713408
    %v251 = vunpack.c.0.s8 %v250
    %v252 = vperm.slane %v246, %v251
    %v254 = vunpack.c.l.s4 1934713408
    %v255 = vunpack.c.0.s8 %v254
    %v256 = vperm.slane %v248, %v255
    %v257 = vrot.slane %v244, 4
    %v258 = vsel %vm165, %v257, %v232
    %v259 = vrot.slane %v232, 4
    %v260 = vsel %vm165, %v244, %v259
    %v262 = vunpack.c.l.s4 1934713408
    %v263 = vunpack.c.0.s8 %v262
    %v264 = vperm.slane %v258, %v263
    %v266 = vunpack.c.l.s4 1934713408
    %v267 = vunpack.c.0.s8 %v266
    %v268 = vperm.slane %v260, %v267
    %v269 = vrot.slane %v252, 4
    %v270 = vsel %vm165, 0.0, %v269
    %v271 = vrot.slane %v256, 4
    %v272 = vsel %vm165, 0.0, %v271
    %v273 = vrot.slane %v264, 4
    %v274 = vsel %vm165, 0.0, %v273
    %v275 = vrot.slane %v268, 4
    %v276 = vsel %vm165, 0.0, %v275
    %v277 = vsel %vm165, %v215, %v196
    %v279 = vunpack.c.l.s4 1983009808
    %v280 = vunpack.c.0.s8 %v279
    %v281 = vperm.slane %v277, %v280
    %v282 = vrot.slane %v216, 4
    %v283 = vsel %vm165, %v282, %v214
    %v285 = vunpack.c.l.s4 1983009808
    %v286 = vunpack.c.0.s8 %v285
    %v287 = vperm.slane %v283, %v286
    %v288 = vsel %vm165, %v219, %v208
    %v290 = vunpack.c.l.s4 1983009808
    %v291 = vunpack.c.0.s8 %v290
    %v292 = vperm.slane %v288, %v291
    %v293 = vrot.slane %v220, 4
    %v294 = vsel %vm165, %v293, %v218
    %v296 = vunpack.c.l.s4 1983009808
    %v297 = vunpack.c.0.s8 %v296
    %v298 = vperm.slane %v294, %v297
    %v299 = vrot.slane %v287, 4
    %v300 = vsel %vm165, %v299, %v281
    %v301 = vrot.slane %v281, 4
    %v302 = vsel %vm165, %v287, %v301
    %v304 = vunpack.c.l.s4 1934713408
    %v305 = vunpack.c.0.s8 %v304
    %v306 = vperm.slane %v300, %v305
    %v308 = vunpack.c.l.s4 1934713408
    %v309 = vunpack.c.0.s8 %v308
    %v310 = vperm.slane %v302, %v309
    %v311 = vrot.slane %v298, 4
    %v312 = vsel %vm165, %v311, %v292
    %v313 = vrot.slane %v292, 4
    %v314 = vsel %vm165, %v298, %v313
    %v316 = vunpack.c.l.s4 1934713408
    %v317 = vunpack.c.0.s8 %v316
    %v318 = vperm.slane %v312, %v317
    %v320 = vunpack.c.l.s4 1934713408
    %v321 = vunpack.c.0.s8 %v320
    %v322 = vperm.slane %v314, %v321
    %v323 = vrot.slane %v318, 4
    %v324 = vsel %vm165, %v323, %v306
    %v325 = vrot.slane %v306, 4
    %v326 = vsel %vm165, %v318, %v325
    %v327 = vrot.slane %v322, 4
    %v328 = vsel %vm165, %v327, %v310
    %v329 = vrot.slane %v310, 4
    %v330 = vsel %vm165, %v322, %v329
    %v331 = vsel %vm165, %v271, %v252
    %v333 = vunpack.c.l.s4 1983009808
    %v334 = vunpack.c.0.s8 %v333
    %v335 = vperm.slane %v331, %v334
    %v336 = vrot.slane %v272, 4
    %v337 = vsel %vm165, %v336, %v270
    %v339 = vunpack.c.l.s4 1983009808
    %v340 = vunpack.c.0.s8 %v339
    %v341 = vperm.slane %v337, %v340
    %v342 = vsel %vm165, %v275, %v264
    %v344 = vunpack.c.l.s4 1983009808
    %v345 = vunpack.c.0.s8 %v344
    %v346 = vperm.slane %v342, %v345
    %v347 = vrot.slane %v276, 4
    %v348 = vsel %vm165, %v347, %v274
    %v350 = vunpack.c.l.s4 1983009808
    %v351 = vunpack.c.0.s8 %v350
    %v352 = vperm.slane %v348, %v351
    %v353 = vrot.slane %v341, 4
    %v354 = vsel %vm165, %v353, %v335
    %v355 = vrot.slane %v335, 4
    %v356 = vsel %vm165, %v341, %v355
    %v358 = vunpack.c.l.s4 1934713408
    %v359 = vunpack.c.0.s8 %v358
    %v360 = vperm.slane %v354, %v359
    %v362 = vunpack.c.l.s4 1934713408
    %v363 = vunpack.c.0.s8 %v362
    %v364 = vperm.slane %v356, %v363
    %v365 = vrot.slane %v352, 4
    %v366 = vsel %vm165, %v365, %v346
    %v367 = vrot.slane %v346, 4
    %v368 = vsel %vm165, %v352, %v367
    %v370 = vunpack.c.l.s4 1934713408
    %v371 = vunpack.c.0.s8 %v370
    %v372 = vperm.slane %v366, %v371
    %v374 = vunpack.c.l.s4 1934713408
    %v375 = vunpack.c.0.s8 %v374
    %v376 = vperm.slane %v368, %v375
    %v377 = vrot.slane %v372, 4
    %v378 = vsel %vm165, %v377, %v360
    %v379 = vrot.slane %v360, 4
    %v380 = vsel %vm165, %v372, %v379
    %v381 = vrot.slane %v376, 4
    %v382 = vsel %vm165, %v381, %v364
    %v383 = vrot.slane %v364, 4
    %v384 = vsel %vm165, %v376, %v383
    %v385 = vpack.c.bf16 %v324, %v324
    %v386 = vpack.c.bf16 %v378, %v378
    %v387 = vpack.c.bf16 %v326, %v326
    %v388 = vpack.c.bf16 %v380, %v380
    %v389 = vpack.c.bf16 %v328, %v328
    %v390 = vpack.c.bf16 %v382, %v382
    %v391 = vpack.c.bf16 %v330, %v330
    %v392 = vpack.c.bf16 %v384, %v384
    %393 = vrot.lane.b32.xlu0 %v135, 96
    %v394 = vpop.permute.xlu0 %393
    %395 = vrot.lane.b32.xlu0 %v137, 96
    %v396 = vpop.permute.xlu0 %395
    %397 = vrot.lane.b32.xlu0 %v147, 96
    %v398 = vpop.permute.xlu0 %397
    %399 = vrot.lane.b32.xlu0 %v149, 96
    %v400 = vpop.permute.xlu0 %399
    %401 = vrot.lane.b32.xlu0 %v153, 96
    %v402 = vpop.permute.xlu0 %401
    %403 = vrot.lane.b32.xlu0 %v155, 96
    %v404 = vpop.permute.xlu0 %403
    %405 = vrot.lane.b32.xlu0 %v159, 96
    %v406 = vpop.permute.xlu0 %405
    %407 = vrot.lane.b32.xlu0 %v161, 96
    %v408 = vpop.permute.xlu0 %407
    %v417 = vrot.slane %v402, 4
    %v418 = vsel %vm165, %v417, %v394
    %v419 = vrot.slane %v394, 4
    %v420 = vsel %vm165, %v402, %v419
    %v422 = vunpack.c.l.s4 1983009808
    %v423 = vunpack.c.0.s8 %v422
    %v424 = vperm.slane %v418, %v423
    %v426 = vunpack.c.l.s4 1983009808
    %v427 = vunpack.c.0.s8 %v426
    %v428 = vperm.slane %v420, %v427
    %v429 = vrot.slane %v406, 4
    %v430 = vsel %vm165, %v429, %v398
    %v431 = vrot.slane %v398, 4
    %v432 = vsel %vm165, %v406, %v431
    %v434 = vunpack.c.l.s4 1983009808
    %v435 = vunpack.c.0.s8 %v434
    %v436 = vperm.slane %v430, %v435
    %v438 = vunpack.c.l.s4 1983009808
    %v439 = vunpack.c.0.s8 %v438
    %v440 = vperm.slane %v432, %v439
    %v441 = vrot.slane %v436, 4
    %v442 = vsel %vm165, %v441, %v424
    %v443 = vrot.slane %v424, 4
    %v444 = vsel %vm165, %v436, %v443
    %v446 = vunpack.c.l.s4 1934713408
    %v447 = vunpack.c.0.s8 %v446
    %v448 = vperm.slane %v442, %v447
    %v450 = vunpack.c.l.s4 1934713408
    %v451 = vunpack.c.0.s8 %v450
    %v452 = vperm.slane %v444, %v451
    %v453 = vrot.slane %v440, 4
    %v454 = vsel %vm165, %v453, %v428
    %v455 = vrot.slane %v428, 4
    %v456 = vsel %vm165, %v440, %v455
    %v458 = vunpack.c.l.s4 1934713408
    %v459 = vunpack.c.0.s8 %v458
    %v460 = vperm.slane %v454, %v459
    %v462 = vunpack.c.l.s4 1934713408
    %v463 = vunpack.c.0.s8 %v462
    %v464 = vperm.slane %v456, %v463
    %v465 = vrot.slane %v448, 4
    %v466 = vsel %vm165, 0.0, %v465
    %v467 = vrot.slane %v452, 4
    %v468 = vsel %vm165, 0.0, %v467
    %v469 = vrot.slane %v460, 4
    %v470 = vsel %vm165, 0.0, %v469
    %v471 = vrot.slane %v464, 4
    %v472 = vsel %vm165, 0.0, %v471
    %v473 = vrot.slane %v404, 4
    %v474 = vsel %vm165, %v473, %v396
    %v475 = vrot.slane %v396, 4
    %v476 = vsel %vm165, %v404, %v475
    %v478 = vunpack.c.l.s4 1983009808
    %v479 = vunpack.c.0.s8 %v478
    %v480 = vperm.slane %v474, %v479
    %v482 = vunpack.c.l.s4 1983009808
    %v483 = vunpack.c.0.s8 %v482
    %v484 = vperm.slane %v476, %v483
    %v485 = vrot.slane %v408, 4
    %v486 = vsel %vm165, %v485, %v400
    %v487 = vrot.slane %v400, 4
    %v488 = vsel %vm165, %v408, %v487
    %v490 = vunpack.c.l.s4 1983009808
    %v491 = vunpack.c.0.s8 %v490
    %v492 = vperm.slane %v486, %v491
    %v494 = vunpack.c.l.s4 1983009808
    %v495 = vunpack.c.0.s8 %v494
    %v496 = vperm.slane %v488, %v495
    %v497 = vrot.slane %v492, 4
    %v498 = vsel %vm165, %v497, %v480
    %v499 = vrot.slane %v480, 4
    %v500 = vsel %vm165, %v492, %v499
    %v502 = vunpack.c.l.s4 1934713408
    %v503 = vunpack.c.0.s8 %v502
    %v504 = vperm.slane %v498, %v503
    %v506 = vunpack.c.l.s4 1934713408
    %v507 = vunpack.c.0.s8 %v506
    %v508 = vperm.slane %v500, %v507
    %v509 = vrot.slane %v496, 4
    %v510 = vsel %vm165, %v509, %v484
    %v511 = vrot.slane %v484, 4
    %v512 = vsel %vm165, %v496, %v511
    %v514 = vunpack.c.l.s4 1934713408
    %v515 = vunpack.c.0.s8 %v514
    %v516 = vperm.slane %v510, %v515
    %v518 = vunpack.c.l.s4 1934713408
    %v519 = vunpack.c.0.s8 %v518
    %v520 = vperm.slane %v512, %v519
    %v521 = vrot.slane %v504, 4
    %v522 = vsel %vm165, 0.0, %v521
    %v523 = vrot.slane %v508, 4
    %v524 = vsel %vm165, 0.0, %v523
    %v525 = vrot.slane %v516, 4
    %v526 = vsel %vm165, 0.0, %v525
    %v527 = vrot.slane %v520, 4
    %v528 = vsel %vm165, 0.0, %v527
    %v529 = vsel %vm165, %v467, %v448
    %v531 = vunpack.c.l.s4 1983009808
    %v532 = vunpack.c.0.s8 %v531
    %v533 = vperm.slane %v529, %v532
    %v534 = vrot.slane %v468, 4
    %v535 = vsel %vm165, %v534, %v466
    %v537 = vunpack.c.l.s4 1983009808
    %v538 = vunpack.c.0.s8 %v537
    %v539 = vperm.slane %v535, %v538
    %v540 = vsel %vm165, %v471, %v460
    %v542 = vunpack.c.l.s4 1983009808
    %v543 = vunpack.c.0.s8 %v542
    %v544 = vperm.slane %v540, %v543
    %v545 = vrot.slane %v472, 4
    %v546 = vsel %vm165, %v545, %v470
    %v548 = vunpack.c.l.s4 1983009808
    %v549 = vunpack.c.0.s8 %v548
    %v550 = vperm.slane %v546, %v549
    %v551 = vrot.slane %v539, 4
    %v552 = vsel %vm165, %v551, %v533
    %v553 = vrot.slane %v533, 4
    %v554 = vsel %vm165, %v539, %v553
    %v556 = vunpack.c.l.s4 1934713408
    %v557 = vunpack.c.0.s8 %v556
    %v558 = vperm.slane %v552, %v557
    %v560 = vunpack.c.l.s4 1934713408
    %v561 = vunpack.c.0.s8 %v560
    %v562 = vperm.slane %v554, %v561
    %v563 = vrot.slane %v550, 4
    %v564 = vsel %vm165, %v563, %v544
    %v565 = vrot.slane %v544, 4
    %v566 = vsel %vm165, %v550, %v565
    %v568 = vunpack.c.l.s4 1934713408
    %v569 = vunpack.c.0.s8 %v568
    %v570 = vperm.slane %v564, %v569
    %v572 = vunpack.c.l.s4 1934713408
    %v573 = vunpack.c.0.s8 %v572
    %v574 = vperm.slane %v566, %v573
    %v575 = vrot.slane %v570, 4
    %v576 = vsel %vm165, %v575, %v558
    %v577 = vrot.slane %v558, 4
    %v578 = vsel %vm165, %v570, %v577
    %v579 = vrot.slane %v574, 4
    %v580 = vsel %vm165, %v579, %v562
    %v581 = vrot.slane %v562, 4
    %v582 = vsel %vm165, %v574, %v581
    %v583 = vsel %vm165, %v523, %v504
    %v585 = vunpack.c.l.s4 1983009808
    %v586 = vunpack.c.0.s8 %v585
    %v587 = vperm.slane %v583, %v586
    %v588 = vrot.slane %v524, 4
    %v589 = vsel %vm165, %v588, %v522
    %v591 = vunpack.c.l.s4 1983009808
    %v592 = vunpack.c.0.s8 %v591
    %v593 = vperm.slane %v589, %v592
    %v594 = vsel %vm165, %v527, %v516
    %v596 = vunpack.c.l.s4 1983009808
    %v597 = vunpack.c.0.s8 %v596
    %v598 = vperm.slane %v594, %v597
    %v599 = vrot.slane %v528, 4
    %v600 = vsel %vm165, %v599, %v526
    %v602 = vunpack.c.l.s4 1983009808
    %v603 = vunpack.c.0.s8 %v602
    %v604 = vperm.slane %v600, %v603
    %v605 = vrot.slane %v593, 4
    %v606 = vsel %vm165, %v605, %v587
    %v607 = vrot.slane %v587, 4
    %v608 = vsel %vm165, %v593, %v607
    %v610 = vunpack.c.l.s4 1934713408
    %v611 = vunpack.c.0.s8 %v610
    %v612 = vperm.slane %v606, %v611
    %v614 = vunpack.c.l.s4 1934713408
    %v615 = vunpack.c.0.s8 %v614
    %v616 = vperm.slane %v608, %v615
    %v617 = vrot.slane %v604, 4
    %v618 = vsel %vm165, %v617, %v598
    %v619 = vrot.slane %v598, 4
    %v620 = vsel %vm165, %v604, %v619
    %v622 = vunpack.c.l.s4 1934713408
    %v623 = vunpack.c.0.s8 %v622
    %v624 = vperm.slane %v618, %v623
    %v626 = vunpack.c.l.s4 1934713408
    %v627 = vunpack.c.0.s8 %v626
    %v628 = vperm.slane %v620, %v627
    %v629 = vrot.slane %v624, 4
    %v630 = vsel %vm165, %v629, %v612
    %v631 = vrot.slane %v612, 4
    %v632 = vsel %vm165, %v624, %v631
    %v633 = vrot.slane %v628, 4
    %v634 = vsel %vm165, %v633, %v616
    %v635 = vrot.slane %v616, 4
    %v636 = vsel %vm165, %v628, %v635
    %v637 = vpack.c.bf16 %v576, %v576
    %v638 = vpack.c.bf16 %v630, %v630
    %v639 = vpack.c.bf16 %v578, %v578
    %v640 = vpack.c.bf16 %v632, %v632
    %v641 = vpack.c.bf16 %v580, %v580
    %v642 = vpack.c.bf16 %v634, %v634
    %v643 = vpack.c.bf16 %v582, %v582
    %v644 = vpack.c.bf16 %v636, %v636
    %647 = vrot.lane.b32.xlu0 %v140, 120
    %v648 = vpop.permute.xlu0 %647
    %649 = vrot.lane.b32.xlu0 %v142, 120
    %v650 = vpop.permute.xlu0 %649
    %651 = vrot.lane.b32.xlu0 %v140, 112
    %v652 = vpop.permute.xlu0 %651
    %653 = vrot.lane.b32.xlu0 %v142, 112
    %v654 = vpop.permute.xlu0 %653
    %655 = vrot.lane.b32.xlu0 %v140, 104
    %v656 = vpop.permute.xlu0 %655
    %657 = vrot.lane.b32.xlu0 %v142, 104
    %v658 = vpop.permute.xlu0 %657
    %659 = vrot.lane.b32.xlu0 %v140, 64
    %v660 = vpop.permute.xlu0 %659
    %661 = vrot.lane.b32.xlu0 %v142, 64
    %v662 = vpop.permute.xlu0 %661
    %663 = vrot.lane.b32.xlu0 %v648, 64
    %v664 = vpop.permute.xlu0 %663
    %665 = vrot.lane.b32.xlu0 %v650, 64
    %v666 = vpop.permute.xlu0 %665
    %667 = vrot.lane.b32.xlu0 %v652, 64
    %v668 = vpop.permute.xlu0 %667
    %669 = vrot.lane.b32.xlu0 %v654, 64
    %v670 = vpop.permute.xlu0 %669
    %671 = vrot.lane.b32.xlu0 %v656, 64
    %v672 = vpop.permute.xlu0 %671
    %673 = vrot.lane.b32.xlu0 %v658, 64
    %v674 = vpop.permute.xlu0 %673
    %v683 = vrot.slane %v668, 4
    %v684 = vsel %vm165, %v683, %v660
    %v685 = vrot.slane %v660, 4
    %v686 = vsel %vm165, %v668, %v685
    %v688 = vunpack.c.l.s4 1983009808
    %v689 = vunpack.c.0.s8 %v688
    %v690 = vperm.slane %v684, %v689
    %v692 = vunpack.c.l.s4 1983009808
    %v693 = vunpack.c.0.s8 %v692
    %v694 = vperm.slane %v686, %v693
    %v695 = vrot.slane %v672, 4
    %v696 = vsel %vm165, %v695, %v664
    %v697 = vrot.slane %v664, 4
    %v698 = vsel %vm165, %v672, %v697
    %v700 = vunpack.c.l.s4 1983009808
    %v701 = vunpack.c.0.s8 %v700
    %v702 = vperm.slane %v696, %v701
    %v704 = vunpack.c.l.s4 1983009808
    %v705 = vunpack.c.0.s8 %v704
    %v706 = vperm.slane %v698, %v705
    %v707 = vrot.slane %v702, 4
    %v708 = vsel %vm165, %v707, %v690
    %v709 = vrot.slane %v690, 4
    %v710 = vsel %vm165, %v702, %v709
    %v712 = vunpack.c.l.s4 1934713408
    %v713 = vunpack.c.0.s8 %v712
    %v714 = vperm.slane %v708, %v713
    %v716 = vunpack.c.l.s4 1934713408
    %v717 = vunpack.c.0.s8 %v716
    %v718 = vperm.slane %v710, %v717
    %v719 = vrot.slane %v706, 4
    %v720 = vsel %vm165, %v719, %v694
    %v721 = vrot.slane %v694, 4
    %v722 = vsel %vm165, %v706, %v721
    %v724 = vunpack.c.l.s4 1934713408
    %v725 = vunpack.c.0.s8 %v724
    %v726 = vperm.slane %v720, %v725
    %v728 = vunpack.c.l.s4 1934713408
    %v729 = vunpack.c.0.s8 %v728
    %v730 = vperm.slane %v722, %v729
    %v731 = vrot.slane %v714, 4
    %v732 = vsel %vm165, 0.0, %v731
    %v733 = vrot.slane %v718, 4
    %v734 = vsel %vm165, 0.0, %v733
    %v735 = vrot.slane %v726, 4
    %v736 = vsel %vm165, 0.0, %v735
    %v737 = vrot.slane %v730, 4
    %v738 = vsel %vm165, 0.0, %v737
    %v739 = vrot.slane %v670, 4
    %v740 = vsel %vm165, %v739, %v662
    %v741 = vrot.slane %v662, 4
    %v742 = vsel %vm165, %v670, %v741
    %v744 = vunpack.c.l.s4 1983009808
    %v745 = vunpack.c.0.s8 %v744
    %v746 = vperm.slane %v740, %v745
    %v748 = vunpack.c.l.s4 1983009808
    %v749 = vunpack.c.0.s8 %v748
    %v750 = vperm.slane %v742, %v749
    %v751 = vrot.slane %v674, 4
    %v752 = vsel %vm165, %v751, %v666
    %v753 = vrot.slane %v666, 4
    %v754 = vsel %vm165, %v674, %v753
    %v756 = vunpack.c.l.s4 1983009808
    %v757 = vunpack.c.0.s8 %v756
    %v758 = vperm.slane %v752, %v757
    %v760 = vunpack.c.l.s4 1983009808
    %v761 = vunpack.c.0.s8 %v760
    %v762 = vperm.slane %v754, %v761
    %v763 = vrot.slane %v758, 4
    %v764 = vsel %vm165, %v763, %v746
    %v765 = vrot.slane %v746, 4
    %v766 = vsel %vm165, %v758, %v765
    %v768 = vunpack.c.l.s4 1934713408
    %v769 = vunpack.c.0.s8 %v768
    %v770 = vperm.slane %v764, %v769
    %v772 = vunpack.c.l.s4 1934713408
    %v773 = vunpack.c.0.s8 %v772
    %v774 = vperm.slane %v766, %v773
    %v775 = vrot.slane %v762, 4
    %v776 = vsel %vm165, %v775, %v750
    %v777 = vrot.slane %v750, 4
    %v778 = vsel %vm165, %v762, %v777
    %v780 = vunpack.c.l.s4 1934713408
    %v781 = vunpack.c.0.s8 %v780
    %v782 = vperm.slane %v776, %v781
    %v784 = vunpack.c.l.s4 1934713408
    %v785 = vunpack.c.0.s8 %v784
    %v786 = vperm.slane %v778, %v785
    %v787 = vrot.slane %v770, 4
    %v788 = vsel %vm165, 0.0, %v787
    %v789 = vrot.slane %v774, 4
    %v790 = vsel %vm165, 0.0, %v789
    %v791 = vrot.slane %v782, 4
    %v792 = vsel %vm165, 0.0, %v791
    %v793 = vrot.slane %v786, 4
    %v794 = vsel %vm165, 0.0, %v793
    %v795 = vsel %vm165, %v733, %v714
    %v797 = vunpack.c.l.s4 1983009808
    %v798 = vunpack.c.0.s8 %v797
    %v799 = vperm.slane %v795, %v798
    %v800 = vrot.slane %v734, 4
    %v801 = vsel %vm165, %v800, %v732
    %v803 = vunpack.c.l.s4 1983009808
    %v804 = vunpack.c.0.s8 %v803
    %v805 = vperm.slane %v801, %v804
    %v806 = vsel %vm165, %v737, %v726
    %v808 = vunpack.c.l.s4 1983009808
    %v809 = vunpack.c.0.s8 %v808
    %v810 = vperm.slane %v806, %v809
    %v811 = vrot.slane %v738, 4
    %v812 = vsel %vm165, %v811, %v736
    %v814 = vunpack.c.l.s4 1983009808
    %v815 = vunpack.c.0.s8 %v814
    %v816 = vperm.slane %v812, %v815
    %v817 = vrot.slane %v805, 4
    %v818 = vsel %vm165, %v817, %v799
    %v819 = vrot.slane %v799, 4
    %v820 = vsel %vm165, %v805, %v819
    %v822 = vunpack.c.l.s4 1934713408
    %v823 = vunpack.c.0.s8 %v822
    %v824 = vperm.slane %v818, %v823
    %v826 = vunpack.c.l.s4 1934713408
    %v827 = vunpack.c.0.s8 %v826
    %v828 = vperm.slane %v820, %v827
    %v829 = vrot.slane %v816, 4
    %v830 = vsel %vm165, %v829, %v810
    %v831 = vrot.slane %v810, 4
    %v832 = vsel %vm165, %v816, %v831
    %v834 = vunpack.c.l.s4 1934713408
    %v835 = vunpack.c.0.s8 %v834
    %v836 = vperm.slane %v830, %v835
    %v838 = vunpack.c.l.s4 1934713408
    %v839 = vunpack.c.0.s8 %v838
    %v840 = vperm.slane %v832, %v839
    %v841 = vrot.slane %v836, 4
    %v842 = vsel %vm165, %v841, %v824
    %v843 = vrot.slane %v824, 4
    %v844 = vsel %vm165, %v836, %v843
    %v845 = vrot.slane %v840, 4
    %v846 = vsel %vm165, %v845, %v828
    %v847 = vrot.slane %v828, 4
    %v848 = vsel %vm165, %v840, %v847
    %v849 = vsel %vm165, %v789, %v770
    %v851 = vunpack.c.l.s4 1983009808
    %v852 = vunpack.c.0.s8 %v851
    %v853 = vperm.slane %v849, %v852
    %v854 = vrot.slane %v790, 4
    %v855 = vsel %vm165, %v854, %v788
    %v857 = vunpack.c.l.s4 1983009808
    %v858 = vunpack.c.0.s8 %v857
    %v859 = vperm.slane %v855, %v858
    %v860 = vsel %vm165, %v793, %v782
    %v862 = vunpack.c.l.s4 1983009808
    %v863 = vunpack.c.0.s8 %v862
    %v864 = vperm.slane %v860, %v863
    %v865 = vrot.slane %v794, 4
    %v866 = vsel %vm165, %v865, %v792
    %v868 = vunpack.c.l.s4 1983009808
    %v869 = vunpack.c.0.s8 %v868
    %v870 = vperm.slane %v866, %v869
    %v871 = vrot.slane %v859, 4
    %v872 = vsel %vm165, %v871, %v853
    %v873 = vrot.slane %v853, 4
    %v874 = vsel %vm165, %v859, %v873
    %v876 = vunpack.c.l.s4 1934713408
    %v877 = vunpack.c.0.s8 %v876
    %v878 = vperm.slane %v872, %v877
    %v880 = vunpack.c.l.s4 1934713408
    %v881 = vunpack.c.0.s8 %v880
    %v882 = vperm.slane %v874, %v881
    %v883 = vrot.slane %v870, 4
    %v884 = vsel %vm165, %v883, %v864
    %v885 = vrot.slane %v864, 4
    %v886 = vsel %vm165, %v870, %v885
    %v888 = vunpack.c.l.s4 1934713408
    %v889 = vunpack.c.0.s8 %v888
    %v890 = vperm.slane %v884, %v889
    %v892 = vunpack.c.l.s4 1934713408
    %v893 = vunpack.c.0.s8 %v892
    %v894 = vperm.slane %v886, %v893
    %v895 = vrot.slane %v890, 4
    %v896 = vsel %vm165, %v895, %v878
    %v897 = vrot.slane %v878, 4
    %v898 = vsel %vm165, %v890, %v897
    %v899 = vrot.slane %v894, 4
    %v900 = vsel %vm165, %v899, %v882
    %v901 = vrot.slane %v882, 4
    %v902 = vsel %vm165, %v894, %v901
    %v903 = vpack.c.bf16 %v842, %v842
    %v904 = vpack.c.bf16 %v896, %v896
    %v905 = vpack.c.bf16 %v844, %v844
    %v906 = vpack.c.bf16 %v898, %v898
    %v907 = vpack.c.bf16 %v846, %v846
    %v908 = vpack.c.bf16 %v900, %v900
    %v909 = vpack.c.bf16 %v848, %v848
    %v910 = vpack.c.bf16 %v902, %v902
    %v911 = vld [vmem:[%s2] sm:$0xff]
    %v912 = vld [vmem:[%s2 + $0x8] sm:$0xff]
    %v915 = vunpack.c.l.b16 %v385
    %v916 = vunpack.c.l.b16 %v386
    %v917 = vpack.c.b16 %v916, %v915
    %v920 = vunpack.c.l.b16 %v637
    %v921 = vunpack.c.l.b16 %v638
    %v922 = vpack.c.b16 %v921, %v920
    %vm923 = vcmask 64512
    %v925 = vsel %vm923, %v917, 0
    %v928 = vsel %vm923, %v922, 0
    %930 = vmatpush.bf16.xpose.msra.mxu0 0
    %931 = vmatpush.bf16.xpose.msra.mxu0 0
    %932 = vmatpush.bf16.xpose.msra.mxu0 0
    %933 = vmatpush.bf16.xpose.msra.mxu0 0
    %934 = vmatpush.bf16.xpose.msra.mxu0 0
    %935 = vmatpush.bf16.xpose.msra.mxu0 0
    %936 = vmatpush.bf16.xpose.msra.mxu0 0
    %937 = vmatpush.bf16.xpose.msra.mxu0 %v928
    %938 = vmatmul.bf16.gmra.mxu0 %v925
    %v939 = vpop.f32.mrf.mxu0
    %v940 = vadd.f32 %v911, %v939
    %v941 = vpop.f32.mrf.mxu0
    %v942 = vadd.f32 %v912, %v941
    %943 = vdwg.mxu0
    %v946 = vunpack.c.l.b16 %v387
    %v947 = vunpack.c.l.b16 %v388
    %v948 = vpack.c.b16 %v947, %v946
    %v951 = vunpack.c.l.b16 %v639
    %v952 = vunpack.c.l.b16 %v640
    %v953 = vpack.c.b16 %v952, %v951
    %v955 = vsel %vm923, %v948, 0
    %v958 = vsel %vm923, %v953, 0
    %960 = vmatpush.bf16.xpose.msra.mxu0 0
    %961 = vmatpush.bf16.xpose.msra.mxu0 0
    %962 = vmatpush.bf16.xpose.msra.mxu0 0
    %963 = vmatpush.bf16.xpose.msra.mxu0 0
    %964 = vmatpush.bf16.xpose.msra.mxu0 0
    %965 = vmatpush.bf16.xpose.msra.mxu0 0
    %966 = vmatpush.bf16.xpose.msra.mxu0 0
    %967 = vmatpush.bf16.xpose.msra.mxu0 %v958
    %968 = vmatmul.bf16.gmra.mxu0 %v955
    %v969 = vpop.f32.mrf.mxu0
    %v970 = vadd.f32 %v911, %v969
    %v971 = vpop.f32.mrf.mxu0
    %v972 = vadd.f32 %v912, %v971
    %973 = vdwg.mxu0
    %v976 = vunpack.c.l.b16 %v389
    %v977 = vunpack.c.l.b16 %v390
    %v978 = vpack.c.b16 %v977, %v976
    %v981 = vunpack.c.l.b16 %v641
    %v982 = vunpack.c.l.b16 %v642
    %v983 = vpack.c.b16 %v982, %v981
    %v985 = vsel %vm923, %v978, 0
    %v988 = vsel %vm923, %v983, 0
    %990 = vmatpush.bf16.xpose.msra.mxu0 0
    %991 = vmatpush.bf16.xpose.msra.mxu0 0
    %992 = vmatpush.bf16.xpose.msra.mxu0 0
    %993 = vmatpush.bf16.xpose.msra.mxu0 0
    %994 = vmatpush.bf16.xpose.msra.mxu0 0
    %995 = vmatpush.bf16.xpose.msra.mxu0 0
    %996 = vmatpush.bf16.xpose.msra.mxu0 0
    %997 = vmatpush.bf16.xpose.msra.mxu0 %v988
    %998 = vmatmul.bf16.gmra.mxu0 %v985
    %v999 = vpop.f32.mrf.mxu0
    %v1000 = vadd.f32 %v911, %v999
    %v1001 = vpop.f32.mrf.mxu0
    %v1002 = vadd.f32 %v912, %v1001
    %1003 = vdwg.mxu0
    %v1006 = vunpack.c.l.b16 %v391
    %v1007 = vunpack.c.l.b16 %v392
    %v1008 = vpack.c.b16 %v1007, %v1006
    %v1011 = vunpack.c.l.b16 %v643
    %v1012 = vunpack.c.l.b16 %v644
    %v1013 = vpack.c.b16 %v1012, %v1011
    %v1015 = vsel %vm923, %v1008, 0
    %v1018 = vsel %vm923, %v1013, 0
    %1020 = vmatpush.bf16.xpose.msra.mxu0 0
    %1021 = vmatpush.bf16.xpose.msra.mxu0 0
    %1022 = vmatpush.bf16.xpose.msra.mxu0 0
    %1023 = vmatpush.bf16.xpose.msra.mxu0 0
    %1024 = vmatpush.bf16.xpose.msra.mxu0 0
    %1025 = vmatpush.bf16.xpose.msra.mxu0 0
    %1026 = vmatpush.bf16.xpose.msra.mxu0 0
    %1027 = vmatpush.bf16.xpose.msra.mxu0 %v1018
    %1028 = vmatmul.bf16.gmra.mxu0 %v1015
    %v1029 = vpop.f32.mrf.mxu0
    %v1030 = vadd.f32 %v911, %v1029
    %v1031 = vpop.f32.mrf.mxu0
    %v1032 = vadd.f32 %v912, %v1031
    %1033 = vdwg.mxu0
    %vm1034 = vcmask 130048
    %v1035 = vsel %vm1034, %v940, -inf
    %1036 = vmax.xlane.f32.xlu0 %v1035
    %v1037 = vpop.xlane.xlu0 %1036
    %v1038 = vsel %vm1034, %v942, -inf
    %1039 = vmax.xlane.f32.xlu0 %v1038
    %v1040 = vpop.xlane.xlu0 %1039
    %v1041 = vsel %vm1034, %v970, -inf
    %1042 = vmax.xlane.f32.xlu0 %v1041
    %v1043 = vpop.xlane.xlu0 %1042
    %v1044 = vsel %vm1034, %v972, -inf
    %1045 = vmax.xlane.f32.xlu0 %v1044
    %v1046 = vpop.xlane.xlu0 %1045
    %v1047 = vsel %vm1034, %v1000, -inf
    %1048 = vmax.xlane.f32.xlu0 %v1047
    %v1049 = vpop.xlane.xlu0 %1048
    %v1050 = vsel %vm1034, %v1002, -inf
    %1051 = vmax.xlane.f32.xlu0 %v1050
    %v1052 = vpop.xlane.xlu0 %1051
    %v1053 = vsel %vm1034, %v1030, -inf
    %1054 = vmax.xlane.f32.xlu0 %v1053
    %v1055 = vpop.xlane.xlu0 %1054
    %v1056 = vsel %vm1034, %v1032, -inf
    %1057 = vmax.xlane.f32.xlu0 %v1056
    %v1058 = vpop.xlane.xlu0 %1057
    %v1059 = vsub.f32 %v940, %v1037
    %v1060 = vsub.f32 %v942, %v1040
    %v1061 = vsub.f32 %v970, %v1043
    %v1062 = vsub.f32 %v972, %v1046
    %v1063 = vsub.f32 %v1000, %v1049
    %v1064 = vsub.f32 %v1002, %v1052
    %v1065 = vsub.f32 %v1030, %v1055
    %v1066 = vsub.f32 %v1032, %v1058
    %v1067 = vmul.f32 %v1059, 1.442695
    %v1068 = vpow.pop %v1067
    %v1069 = vmul.f32 %v1060, 1.442695
    %v1070 = vpow.pop %v1069
    %v1071 = vmul.f32 %v1061, 1.442695
    %v1072 = vpow.pop %v1071
    %v1073 = vmul.f32 %v1062, 1.442695
    %v1074 = vpow.pop %v1073
    %v1075 = vmul.f32 %v1063, 1.442695
    %v1076 = vpow.pop %v1075
    %v1077 = vmul.f32 %v1064, 1.442695
    %v1078 = vpow.pop %v1077
    %v1079 = vmul.f32 %v1065, 1.442695
    %v1080 = vpow.pop %v1079
    %v1081 = vmul.f32 %v1066, 1.442695
    %v1082 = vpow.pop %v1081
    %v1083 = vsel %vm1034, %v1068, 0.0
    %1084 = vadd.xlane.f32.xlu0 %v1083
    %v1085 = vpop.xlane.xlu0 %1084
    %v1086 = vsel %vm1034, %v1070, 0.0
    %1087 = vadd.xlane.f32.xlu0 %v1086
    %v1088 = vpop.xlane.xlu0 %1087
    %v1089 = vsel %vm1034, %v1072, 0.0
    %1090 = vadd.xlane.f32.xlu0 %v1089
    %v1091 = vpop.xlane.xlu0 %1090
    %v1092 = vsel %vm1034, %v1074, 0.0
    %1093 = vadd.xlane.f32.xlu0 %v1092
    %v1094 = vpop.xlane.xlu0 %1093
    %v1095 = vsel %vm1034, %v1076, 0.0
    %1096 = vadd.xlane.f32.xlu0 %v1095
    %v1097 = vpop.xlane.xlu0 %1096
    %v1098 = vsel %vm1034, %v1078, 0.0
    %1099 = vadd.xlane.f32.xlu0 %v1098
    %v1100 = vpop.xlane.xlu0 %1099
    %v1101 = vsel %vm1034, %v1080, 0.0
    %1102 = vadd.xlane.f32.xlu0 %v1101
    %v1103 = vpop.xlane.xlu0 %1102
    %v1104 = vsel %vm1034, %v1082, 0.0
    %1105 = vadd.xlane.f32.xlu0 %v1104
    %v1106 = vpop.xlane.xlu0 %1105
    %v1107 = vrcp.pop %v1085
    %v1108 = vrcp.pop %v1088
    %v1109 = vrcp.pop %v1091
    %v1110 = vrcp.pop %v1094
    %v1111 = vrcp.pop %v1097
    %v1112 = vrcp.pop %v1100
    %v1113 = vrcp.pop %v1103
    %v1114 = vrcp.pop %v1106
    %v1115 = vmul.f32 %v1068, %v1107
    %v1116 = vmul.f32 %v1070, %v1108
    %v1117 = vmul.f32 %v1072, %v1109
    %v1118 = vmul.f32 %v1074, %v1110
    %v1119 = vmul.f32 %v1076, %v1111
    %v1120 = vmul.f32 %v1078, %v1112
    %v1121 = vmul.f32 %v1080, %v1113
    %v1122 = vmul.f32 %v1082, %v1114
    %v1123 = vpack.c.bf16 %v1115, %v1115
    %v1124 = vpack.c.bf16 %v1116, %v1116
    %v1125 = vpack.c.bf16 %v1117, %v1117
    %v1126 = vpack.c.bf16 %v1118, %v1118
    %v1127 = vpack.c.bf16 %v1119, %v1119
    %v1128 = vpack.c.bf16 %v1120, %v1120
    %v1129 = vpack.c.bf16 %v1121, %v1121
    %v1130 = vpack.c.bf16 %v1122, %v1122
    %v1133 = vunpack.c.l.b16 %v1123
    %v1134 = vunpack.c.l.b16 %v1124
    %v1135 = vpack.c.b16 %v1134, %v1133
    %v1138 = vunpack.c.l.b16 %v903
    %v1139 = vunpack.c.l.b16 %v904
    %v1140 = vpack.c.b16 %v1139, %v1138
    %v1143 = vsel %vm1034, %v1135, 0
    %1145 = vmatpush.bf16.msra.mxu0 0
    %1146 = vmatpush.bf16.msra.mxu0 0
    %1147 = vmatpush.bf16.msra.mxu0 0
    %1148 = vmatpush.bf16.msra.mxu0 0
    %1149 = vmatpush.bf16.msra.mxu0 0
    %1150 = vmatpush.bf16.msra.mxu0 0
    %1151 = vmatpush.bf16.msra.mxu0 0
    %1152 = vmatpush.bf16.msra.mxu0 %v1140
    %1153 = vmatmul.bf16.gmra.mxu0 %v1143
    %v1154 = vpop.f32.mrf.mxu0
    %v1155 = vadd.f32 0.0, %v1154
    %v1156 = vpop.f32.mrf.mxu0
    %v1157 = vadd.f32 0.0, %v1156
    %1158 = vdwg.mxu0
    %v1161 = vunpack.c.l.b16 %v1125
    %v1162 = vunpack.c.l.b16 %v1126
    %v1163 = vpack.c.b16 %v1162, %v1161
    %v1166 = vunpack.c.l.b16 %v905
    %v1167 = vunpack.c.l.b16 %v906
    %v1168 = vpack.c.b16 %v1167, %v1166
    %v1171 = vsel %vm1034, %v1163, 0
    %1173 = vmatpush.bf16.msra.mxu0 0
    %1174 = vmatpush.bf16.msra.mxu0 0
    %1175 = vmatpush.bf16.msra.mxu0 0
    %1176 = vmatpush.bf16.msra.mxu0 0
    %1177 = vmatpush.bf16.msra.mxu0 0
    %1178 = vmatpush.bf16.msra.mxu0 0
    %1179 = vmatpush.bf16.msra.mxu0 0
    %1180 = vmatpush.bf16.msra.mxu0 %v1168
    %1181 = vmatmul.bf16.gmra.mxu0 %v1171
    %v1182 = vpop.f32.mrf.mxu0
    %v1183 = vadd.f32 0.0, %v1182
    %v1184 = vpop.f32.mrf.mxu0
    %v1185 = vadd.f32 0.0, %v1184
    %1186 = vdwg.mxu0
    %v1189 = vunpack.c.l.b16 %v1127
    %v1190 = vunpack.c.l.b16 %v1128
    %v1191 = vpack.c.b16 %v1190, %v1189
    %v1194 = vunpack.c.l.b16 %v907
    %v1195 = vunpack.c.l.b16 %v908
    %v1196 = vpack.c.b16 %v1195, %v1194
    %v1199 = vsel %vm1034, %v1191, 0
    %1201 = vmatpush.bf16.msra.mxu0 0
    %1202 = vmatpush.bf16.msra.mxu0 0
    %1203 = vmatpush.bf16.msra.mxu0 0
    %1204 = vmatpush.bf16.msra.mxu0 0
    %1205 = vmatpush.bf16.msra.mxu0 0
    %1206 = vmatpush.bf16.msra.mxu0 0
    %1207 = vmatpush.bf16.msra.mxu0 0
    %1208 = vmatpush.bf16.msra.mxu0 %v1196
    %1209 = vmatmul.bf16.gmra.mxu0 %v1199
    %v1210 = vpop.f32.mrf.mxu0
    %v1211 = vadd.f32 0.0, %v1210
    %v1212 = vpop.f32.mrf.mxu0
    %v1213 = vadd.f32 0.0, %v1212
    %1214 = vdwg.mxu0
    %v1217 = vunpack.c.l.b16 %v1129
    %v1218 = vunpack.c.l.b16 %v1130
    %v1219 = vpack.c.b16 %v1218, %v1217
    %v1222 = vunpack.c.l.b16 %v909
    %v1223 = vunpack.c.l.b16 %v910
    %v1224 = vpack.c.b16 %v1223, %v1222
    %v1227 = vsel %vm1034, %v1219, 0
    %1229 = vmatpush.bf16.msra.mxu0 0
    %1230 = vmatpush.bf16.msra.mxu0 0
    %1231 = vmatpush.bf16.msra.mxu0 0
    %1232 = vmatpush.bf16.msra.mxu0 0
    %1233 = vmatpush.bf16.msra.mxu0 0
    %1234 = vmatpush.bf16.msra.mxu0 0
    %1235 = vmatpush.bf16.msra.mxu0 0
    %1236 = vmatpush.bf16.msra.mxu0 %v1224
    %1237 = vmatmul.bf16.gmra.mxu0 %v1227
    %v1238 = vpop.f32.mrf.mxu0
    %v1239 = vadd.f32 0.0, %v1238
    %v1240 = vpop.f32.mrf.mxu0
    %v1241 = vadd.f32 0.0, %v1240
    %1242 = vdwg.mxu0
    %v1243 = vrot.slane %v1211, 4
    %v1244 = vsel %vm165, %v1243, %v1155
    %v1245 = vrot.slane %v1155, 4
    %v1246 = vsel %vm165, %v1211, %v1245
    %v1248 = vunpack.c.l.s4 1983009808
    %v1249 = vunpack.c.0.s8 %v1248
    %v1250 = vperm.slane %v1244, %v1249
    %v1252 = vunpack.c.l.s4 1983009808
    %v1253 = vunpack.c.0.s8 %v1252
    %v1254 = vperm.slane %v1246, %v1253
    %v1255 = vrot.slane %v1239, 4
    %v1256 = vsel %vm165, %v1255, %v1183
    %v1257 = vrot.slane %v1183, 4
    %v1258 = vsel %vm165, %v1239, %v1257
    %v1260 = vunpack.c.l.s4 1983009808
    %v1261 = vunpack.c.0.s8 %v1260
    %v1262 = vperm.slane %v1256, %v1261
    %v1264 = vunpack.c.l.s4 1983009808
    %v1265 = vunpack.c.0.s8 %v1264
    %v1266 = vperm.slane %v1258, %v1265
    %v1267 = vrot.slane %v1262, 4
    %v1268 = vsel %vm165, %v1267, %v1250
    %v1269 = vrot.slane %v1250, 4
    %v1270 = vsel %vm165, %v1262, %v1269
    %v1272 = vunpack.c.l.s4 1934713408
    %v1273 = vunpack.c.0.s8 %v1272
    %v1274 = vperm.slane %v1268, %v1273
    %v1276 = vunpack.c.l.s4 1934713408
    %v1277 = vunpack.c.0.s8 %v1276
    %v1278 = vperm.slane %v1270, %v1277
    %v1279 = vrot.slane %v1266, 4
    %v1280 = vsel %vm165, %v1279, %v1254
    %v1281 = vrot.slane %v1254, 4
    %v1282 = vsel %vm165, %v1266, %v1281
    %v1284 = vunpack.c.l.s4 1934713408
    %v1285 = vunpack.c.0.s8 %v1284
    %v1286 = vperm.slane %v1280, %v1285
    %v1288 = vunpack.c.l.s4 1934713408
    %v1289 = vunpack.c.0.s8 %v1288
    %v1290 = vperm.slane %v1282, %v1289
    %v1291 = vrot.slane %v1274, 4
    %v1292 = vsel %vm165, 0.0, %v1291
    %v1293 = vrot.slane %v1278, 4
    %v1294 = vsel %vm165, 0.0, %v1293
    %v1295 = vrot.slane %v1286, 4
    %v1296 = vsel %vm165, 0.0, %v1295
    %v1297 = vrot.slane %v1290, 4
    %v1298 = vsel %vm165, 0.0, %v1297
    %v1299 = vrot.slane %v1213, 4
    %v1300 = vsel %vm165, %v1299, %v1157
    %v1301 = vrot.slane %v1157, 4
    %v1302 = vsel %vm165, %v1213, %v1301
    %v1304 = vunpack.c.l.s4 1983009808
    %v1305 = vunpack.c.0.s8 %v1304
    %v1306 = vperm.slane %v1300, %v1305
    %v1308 = vunpack.c.l.s4 1983009808
    %v1309 = vunpack.c.0.s8 %v1308
    %v1310 = vperm.slane %v1302, %v1309
    %v1311 = vrot.slane %v1241, 4
    %v1312 = vsel %vm165, %v1311, %v1185
    %v1313 = vrot.slane %v1185, 4
    %v1314 = vsel %vm165, %v1241, %v1313
    %v1316 = vunpack.c.l.s4 1983009808
    %v1317 = vunpack.c.0.s8 %v1316
    %v1318 = vperm.slane %v1312, %v1317
    %v1320 = vunpack.c.l.s4 1983009808
    %v1321 = vunpack.c.0.s8 %v1320
    %v1322 = vperm.slane %v1314, %v1321
    %v1323 = vrot.slane %v1318, 4
    %v1324 = vsel %vm165, %v1323, %v1306
    %v1325 = vrot.slane %v1306, 4
    %v1326 = vsel %vm165, %v1318, %v1325
    %v1328 = vunpack.c.l.s4 1934713408
    %v1329 = vunpack.c.0.s8 %v1328
    %v1330 = vperm.slane %v1324, %v1329
    %v1332 = vunpack.c.l.s4 1934713408
    %v1333 = vunpack.c.0.s8 %v1332
    %v1334 = vperm.slane %v1326, %v1333
    %v1335 = vrot.slane %v1322, 4
    %v1336 = vsel %vm165, %v1335, %v1310
    %v1337 = vrot.slane %v1310, 4
    %v1338 = vsel %vm165, %v1322, %v1337
    %v1340 = vunpack.c.l.s4 1934713408
    %v1341 = vunpack.c.0.s8 %v1340
    %v1342 = vperm.slane %v1336, %v1341
    %v1344 = vunpack.c.l.s4 1934713408
    %v1345 = vunpack.c.0.s8 %v1344
    %v1346 = vperm.slane %v1338, %v1345
    %v1347 = vrot.slane %v1330, 4
    %v1348 = vsel %vm165, 0.0, %v1347
    %v1349 = vrot.slane %v1334, 4
    %v1350 = vsel %vm165, 0.0, %v1349
    %v1351 = vrot.slane %v1342, 4
    %v1352 = vsel %vm165, 0.0, %v1351
    %v1353 = vrot.slane %v1346, 4
    %v1354 = vsel %vm165, 0.0, %v1353
    %v1355 = vsel %vm165, %v1293, %v1274
    %v1357 = vunpack.c.l.s4 1983009808
    %v1358 = vunpack.c.0.s8 %v1357
    %v1359 = vperm.slane %v1355, %v1358
    %v1360 = vrot.slane %v1294, 4
    %v1361 = vsel %vm165, %v1360, %v1292
    %v1363 = vunpack.c.l.s4 1983009808
    %v1364 = vunpack.c.0.s8 %v1363
    %v1365 = vperm.slane %v1361, %v1364
    %v1366 = vsel %vm165, %v1297, %v1286
    %v1368 = vunpack.c.l.s4 1983009808
    %v1369 = vunpack.c.0.s8 %v1368
    %v1370 = vperm.slane %v1366, %v1369
    %v1371 = vrot.slane %v1298, 4
    %v1372 = vsel %vm165, %v1371, %v1296
    %v1374 = vunpack.c.l.s4 1983009808
    %v1375 = vunpack.c.0.s8 %v1374
    %v1376 = vperm.slane %v1372, %v1375
    %v1377 = vrot.slane %v1365, 4
    %v1378 = vsel %vm165, %v1377, %v1359
    %v1379 = vrot.slane %v1359, 4
    %v1380 = vsel %vm165, %v1365, %v1379
    %v1382 = vunpack.c.l.s4 1934713408
    %v1383 = vunpack.c.0.s8 %v1382
    %v1384 = vperm.slane %v1378, %v1383
    %v1386 = vunpack.c.l.s4 1934713408
    %v1387 = vunpack.c.0.s8 %v1386
    %v1388 = vperm.slane %v1380, %v1387
    %v1389 = vrot.slane %v1376, 4
    %v1390 = vsel %vm165, %v1389, %v1370
    %v1391 = vrot.slane %v1370, 4
    %v1392 = vsel %vm165, %v1376, %v1391
    %v1394 = vunpack.c.l.s4 1934713408
    %v1395 = vunpack.c.0.s8 %v1394
    %v1396 = vperm.slane %v1390, %v1395
    %v1398 = vunpack.c.l.s4 1934713408
    %v1399 = vunpack.c.0.s8 %v1398
    %v1400 = vperm.slane %v1392, %v1399
    %v1401 = vrot.slane %v1396, 4
    %v1402 = vsel %vm165, %v1401, %v1384
    %v1403 = vrot.slane %v1384, 4
    %v1404 = vsel %vm165, %v1396, %v1403
    %v1405 = vrot.slane %v1400, 4
    %v1406 = vsel %vm165, %v1405, %v1388
    %v1407 = vrot.slane %v1388, 4
    %v1408 = vsel %vm165, %v1400, %v1407
    %v1409 = vsel %vm165, %v1349, %v1330
    %v1411 = vunpack.c.l.s4 1983009808
    %v1412 = vunpack.c.0.s8 %v1411
    %v1413 = vperm.slane %v1409, %v1412
    %v1414 = vrot.slane %v1350, 4
    %v1415 = vsel %vm165, %v1414, %v1348
    %v1417 = vunpack.c.l.s4 1983009808
    %v1418 = vunpack.c.0.s8 %v1417
    %v1419 = vperm.slane %v1415, %v1418
    %v1420 = vsel %vm165, %v1353, %v1342
    %v1422 = vunpack.c.l.s4 1983009808
    %v1423 = vunpack.c.0.s8 %v1422
    %v1424 = vperm.slane %v1420, %v1423
    %v1425 = vrot.slane %v1354, 4
    %v1426 = vsel %vm165, %v1425, %v1352
    %v1428 = vunpack.c.l.s4 1983009808
    %v1429 = vunpack.c.0.s8 %v1428
    %v1430 = vperm.slane %v1426, %v1429
    %v1431 = vrot.slane %v1419, 4
    %v1432 = vsel %vm165, %v1431, %v1413
    %v1433 = vrot.slane %v1413, 4
    %v1434 = vsel %vm165, %v1419, %v1433
    %v1436 = vunpack.c.l.s4 1934713408
    %v1437 = vunpack.c.0.s8 %v1436
    %v1438 = vperm.slane %v1432, %v1437
    %v1440 = vunpack.c.l.s4 1934713408
    %v1441 = vunpack.c.0.s8 %v1440
    %v1442 = vperm.slane %v1434, %v1441
    %v1443 = vrot.slane %v1430, 4
    %v1444 = vsel %vm165, %v1443, %v1424
    %v1445 = vrot.slane %v1424, 4
    %v1446 = vsel %vm165, %v1430, %v1445
    %v1448 = vunpack.c.l.s4 1934713408
    %v1449 = vunpack.c.0.s8 %v1448
    %v1450 = vperm.slane %v1444, %v1449
    %v1452 = vunpack.c.l.s4 1934713408
    %v1453 = vunpack.c.0.s8 %v1452
    %v1454 = vperm.slane %v1446, %v1453
    %v1455 = vrot.slane %v1450, 4
    %v1456 = vsel %vm165, %v1455, %v1438
    %v1457 = vrot.slane %v1438, 4
    %v1458 = vsel %vm165, %v1450, %v1457
    %v1459 = vrot.slane %v1454, 4
    %v1460 = vsel %vm165, %v1459, %v1442
    %v1461 = vrot.slane %v1442, 4
    %v1462 = vsel %vm165, %v1454, %v1461
    %1465 = vrot.lane.b32.xlu0 %v1404, 8
    %v1466 = vpop.permute.xlu0 %1465
    %1467 = vrot.lane.b32.xlu0 %v1458, 8
    %v1468 = vpop.permute.xlu0 %1467
    %1473 = vrot.lane.b32.xlu0 %v1406, 16
    %v1474 = vpop.permute.xlu0 %1473
    %1475 = vrot.lane.b32.xlu0 %v1460, 16
    %v1476 = vpop.permute.xlu0 %1475
    %1481 = vrot.lane.b32.xlu0 %v1408, 24
    %v1482 = vpop.permute.xlu0 %1481
    %1483 = vrot.lane.b32.xlu0 %v1462, 24
    %v1484 = vpop.permute.xlu0 %1483
    %v1487 = vsel %vm923, %v1402, %v1466
    %v1488 = vsel %vm923, %v1456, %v1468
    %v1489 = vsel %vm1034, %v1487, %v1474
    %v1490 = vsel %vm1034, %v1488, %v1476
    %vm1491 = vcmask 195584
    %v1492 = vsel %vm1491, %v1489, %v1482
    %v1493 = vsel %vm1491, %v1490, %v1484
    %v1494 = vpack.c.bf16 %v1493, %v1492
    %v1495 = vld [vmem:[#allocation5] sm:$0xf]
    %v1496 = vld [vmem:[#allocation5 + $0x4] sm:$0xf]
    %v1497 = vld [vmem:[#allocation5 + $0x8] sm:$0xf]
    %v1498 = vld [vmem:[#allocation5 + $0xc] sm:$0xf]
    %v1499 = vperm.slane %v98, 2
    %v1504 = vunpack.c.l.b16 %v1495
    %v1505 = vunpack.c.l.b16 %v1496
    %v1506 = vunpack.c.l.b16 %v1497
    %v1507 = vunpack.c.l.b16 %v1498
    %v1508 = vpack.c.b16 %v1505, %v1504
    %v1509 = vpack.c.b16 %v1507, %v1506
    %v1513 = vsel %vm118, %v1494, 0
    %1515 = vmatpush.bf16.msra.mxu0 0
    %1516 = vmatpush.bf16.msra.mxu0 0
    %1517 = vmatpush.bf16.msra.mxu0 0
    %1518 = vmatpush.bf16.msra.mxu0 0
    %1519 = vmatpush.bf16.msra.mxu0 0
    %1520 = vmatpush.bf16.msra.mxu0 0
    %1521 = vmatpush.bf16.msra.mxu0 %v1509
    %1522 = vmatpush.bf16.msra.mxu0 %v1508
    %1523 = vmatmul.bf16.gmra.mxu0 %v1513
    %v1524 = vpop.f32.mrf.mxu0
    %v1525 = vadd.f32 %v1499, %v1524
    %v1526 = vpop.f32.mrf.mxu0
    %v1527 = vadd.f32 %v1499, %v1526
    %1528 = vdwg.mxu0
    %v1529 = vadd.f32 %v92, %v1525
    %v1530 = vadd.f32 %v93, %v1527
    %v1531 = vsel %vm118, %v1529, 0.0
    %1532 = vadd.xlane.f32.xlu0 %v1531
    %v1533 = vpop.xlane.xlu0 %1532
    %v1534 = vsel %vm118, %v1530, 0.0
    %1535 = vadd.xlane.f32.xlu0 %v1534
    %v1536 = vpop.xlane.xlu0 %1535
    %v1537 = vrcp.pop 32.0
    %v1538 = vmul.f32 32.0, %v1537
    %v1539 = vsub.f32 1.0, %v1538
    %v1540 = vmul.f32 %v1537, %v1539
    %v1541 = vadd.f32 %v1537, %v1540
    %vm1542 = vweird.f32 %v1537
    %v1543 = vsel %vm1542, %v1537, %v1541
    %v1544 = vmul.f32 %v1533, %v1543
    %v1545 = vmul.f32 %v1536, %v1543
    %v1546 = vsub.f32 %v1529, %v1544
    %v1547 = vsub.f32 %v1530, %v1545
    %v1548 = vmul.f32 %v1546, %v1546
    %v1549 = vmul.f32 %v1547, %v1547
    %v1550 = vsel %vm118, %v1548, 0.0
    %1551 = vadd.xlane.f32.xlu0 %v1550
    %v1552 = vpop.xlane.xlu0 %1551
    %v1553 = vsel %vm118, %v1549, 0.0
    %1554 = vadd.xlane.f32.xlu0 %v1553
    %v1555 = vpop.xlane.xlu0 %1554
    %v1556 = vmul.f32 %v1552, %v1543
    %v1557 = vmul.f32 %v1555, %v1543
    %v1558 = vadd.f32 %v1556, 1e-05
    %v1559 = vadd.f32 %v1557, 1e-05
    %v1560 = vrsqrt.pop %v1558
    %v1561 = vmul.f32 %v1560, %v1558
    %v1562 = vmul.f32 %v1561, %v1560
    %v1563 = vmul.f32 0.5, %v1562
    %v1564 = vsub.f32 1.5, %v1563
    %v1565 = vmul.f32 %v1560, %v1564
    %vm1566 = vweird.f32 %v1558
    %vm1567 = vweird.f32 %v1560
    %vm1568 = vmor %vm1566, %vm1567
    %v1569 = vsel %vm1568, %v1560, %v1565
    %v1570 = vrsqrt.pop %v1559
    %v1571 = vmul.f32 %v1570, %v1559
    %v1572 = vmul.f32 %v1571, %v1570
    %v1573 = vmul.f32 0.5, %v1572
    %v1574 = vsub.f32 1.5, %v1573
    %v1575 = vmul.f32 %v1570, %v1574
    %vm1576 = vweird.f32 %v1559
    %vm1577 = vweird.f32 %v1570
    %vm1578 = vmor %vm1576, %vm1577
    %v1579 = vsel %vm1578, %v1570, %v1575
    %v1580 = vmul.f32 %v1546, %v1569
    %v1581 = vmul.f32 %v1547, %v1579
    %v1582 = vperm.slane %v98, 3
    %v1583 = vmul.f32 %v1580, %v1582
    %v1584 = vmul.f32 %v1581, %v1582
    %v1585 = vperm.slane %v98, 4
    %v1586 = vadd.f32 %v1583, %v1585
    %v1587 = vadd.f32 %v1584, %v1585
    %v1588 = vpack.c.bf16 %v1587, %v1586
    %v1589 = vld [vmem:[#allocation7] sm:$0xf]
    %v1590 = vld [vmem:[#allocation7 + $0x4] sm:$0xf]
    %v1591 = vld [vmem:[#allocation7 + $0x8] sm:$0xf]
    %v1592 = vld [vmem:[#allocation7 + $0xc] sm:$0xf]
    %v1593 = vperm.slane %v98, 1
    %v1598 = vunpack.c.l.b16 %v1589
    %v1599 = vunpack.c.l.b16 %v1590
    %v1600 = vunpack.c.l.b16 %v1591
    %v1601 = vunpack.c.l.b16 %v1592
    %v1602 = vpack.c.b16 %v1599, %v1598
    %v1603 = vpack.c.b16 %v1601, %v1600
    %v1607 = vsel %vm118, %v1588, 0
    %1609 = vmatpush.bf16.msra.mxu0 0
    %1610 = vmatpush.bf16.msra.mxu0 0
    %1611 = vmatpush.bf16.msra.mxu0 0
    %1612 = vmatpush.bf16.msra.mxu0 0
    %1613 = vmatpush.bf16.msra.mxu0 0
    %1614 = vmatpush.bf16.msra.mxu0 0
    %1615 = vmatpush.bf16.msra.mxu0 %v1603
    %1616 = vmatpush.bf16.msra.mxu0 %v1602
    %1617 = vmatmul.bf16.gmra.mxu0 %v1607
    %v1618 = vpop.f32.mrf.mxu0
    %v1619 = vadd.f32 %v1593, %v1618
    %v1620 = vpop.f32.mrf.mxu0
    %v1621 = vadd.f32 %v1593, %v1620
    %1622 = vdwg.mxu0
    %v1623 = vmax.f32 %v1619, 0.0
    %v1624 = vmax.f32 %v1621, 0.0
    %v1625 = vpack.c.bf16 %v1624, %v1623
    %v1626 = vld [vmem:[%s6] sm:$0xf]
    %v1627 = vld [vmem:[%s6 + $0x4] sm:$0xf]
    %v1628 = vld [vmem:[%s6 + $0x8] sm:$0xf]
    %v1629 = vld [vmem:[%s6 + $0xc] sm:$0xf]
    %v1630 = vld [vmem:[%s6 + $0x10] sm:$0xf]
    %v1631 = vld [vmem:[%s6 + $0x14] sm:$0xf]
    %v1632 = vld [vmem:[%s6 + $0x18] sm:$0xf]
    %v1633 = vld [vmem:[%s6 + $0x1c] sm:$0xf]
    %v1634 = vperm.slane %v98, 5
    %v1643 = vunpack.c.l.b16 %v1626
    %v1644 = vunpack.c.l.b16 %v1627
    %v1645 = vunpack.c.l.b16 %v1628
    %v1646 = vunpack.c.l.b16 %v1629
    %v1647 = vunpack.c.l.b16 %v1630
    %v1648 = vunpack.c.l.b16 %v1631
    %v1649 = vunpack.c.l.b16 %v1632
    %v1650 = vunpack.c.l.b16 %v1633
    %v1651 = vpack.c.b16 %v1644, %v1643
    %v1652 = vpack.c.b16 %v1646, %v1645
    %v1653 = vpack.c.b16 %v1648, %v1647
    %v1654 = vpack.c.b16 %v1650, %v1649
    %vm1659 = vcmask 523264
    %v1661 = vsel %vm1659, %v1625, 0
    %1663 = vmatpush.bf16.msra.mxu0 0
    %1664 = vmatpush.bf16.msra.mxu0 0
    %1665 = vmatpush.bf16.msra.mxu0 0
    %1666 = vmatpush.bf16.msra.mxu0 0
    %1667 = vmatpush.bf16.msra.mxu0 %v1654
    %1668 = vmatpush.bf16.msra.mxu0 %v1653
    %1669 = vmatpush.bf16.msra.mxu0 %v1652
    %1670 = vmatpush.bf16.msra.mxu0 %v1651
    %1671 = vmatmul.bf16.gmra.mxu0 %v1661
    %v1672 = vpop.f32.mrf.mxu0
    %v1673 = vadd.f32 %v1634, %v1672
    %v1674 = vpop.f32.mrf.mxu0
    %v1675 = vadd.f32 %v1634, %v1674
    %1676 = vdwg.mxu0
    %v1677 = vadd.f32 %v1586, %v1673
    %v1678 = vadd.f32 %v1587, %v1675
    %v1679 = vsel %vm118, %v1677, 0.0
    %1680 = vadd.xlane.f32.xlu0 %v1679
    %v1681 = vpop.xlane.xlu0 %1680
    %v1682 = vsel %vm118, %v1678, 0.0
    %1683 = vadd.xlane.f32.xlu0 %v1682
    %v1684 = vpop.xlane.xlu0 %1683
    %v1685 = vmul.f32 %v1681, %v1543
    %v1686 = vmul.f32 %v1684, %v1543
    %v1687 = vsub.f32 %v1677, %v1685
    %v1688 = vsub.f32 %v1678, %v1686
    %v1689 = vmul.f32 %v1687, %v1687
    %v1690 = vmul.f32 %v1688, %v1688
    %v1691 = vsel %vm118, %v1689, 0.0
    %1692 = vadd.xlane.f32.xlu0 %v1691
    %v1693 = vpop.xlane.xlu0 %1692
    %v1694 = vsel %vm118, %v1690, 0.0
    %1695 = vadd.xlane.f32.xlu0 %v1694
    %v1696 = vpop.xlane.xlu0 %1695
    %v1697 = vmul.f32 %v1693, %v1543
    %v1698 = vmul.f32 %v1696, %v1543
    %v1699 = vadd.f32 %v1697, 1e-05
    %v1700 = vadd.f32 %v1698, 1e-05
    %v1701 = vrsqrt.pop %v1699
    %v1702 = vmul.f32 %v1701, %v1699
    %v1703 = vmul.f32 %v1702, %v1701
    %v1704 = vmul.f32 0.5, %v1703
    %v1705 = vsub.f32 1.5, %v1704
    %v1706 = vmul.f32 %v1701, %v1705
    %vm1707 = vweird.f32 %v1699
    %vm1708 = vweird.f32 %v1701
    %vm1709 = vmor %vm1707, %vm1708
    %v1710 = vsel %vm1709, %v1701, %v1706
    %v1711 = vrsqrt.pop %v1700
    %v1712 = vmul.f32 %v1711, %v1700
    %v1713 = vmul.f32 %v1712, %v1711
    %v1714 = vmul.f32 0.5, %v1713
    %v1715 = vsub.f32 1.5, %v1714
    %v1716 = vmul.f32 %v1711, %v1715
    %vm1717 = vweird.f32 %v1700
    %vm1718 = vweird.f32 %v1711
    %vm1719 = vmor %vm1717, %vm1718
    %v1720 = vsel %vm1719, %v1711, %v1716
    %v1721 = vmul.f32 %v1687, %v1710
    %v1722 = vmul.f32 %v1688, %v1720
    %v1723 = vperm.slane %v98, 6
    %v1724 = vmul.f32 %v1721, %v1723
    %v1725 = vmul.f32 %v1722, %v1723
    %v1726 = vperm.slane %v98, 7
    %v1727 = vadd.f32 %v1724, %v1726
    %v1728 = vadd.f32 %v1725, %v1726
    %1729 = vst.msk [vmem:[#allocation10] sm:$0xff] %vm118, %v1727
    %1730 = vst.msk [vmem:[#allocation10 + $0x8] sm:$0xff] %vm118, %v1728
    // Predicated region
    $region50: #{transformer_encoder_layer.1} parent=1 // pred_check
      _
    $region51: #{transformer_encoder_layer.1} parent=1 // pred_check_branch
      %1732 = sbr.rel (0) target = $region53
    $region52: #{transformer_encoder_layer.1} parent=1 // pred_region
      %1734 = vsyncadd [#allocation4], 0
      %s1735 = sshll.u32 [#allocation10], 4
      %s1736 = int_to_ptr.vmem [resolvable:$true] %s1735
      %s1737 = sshll.u32 %s8, 4
      %s1738 = int_to_ptr.hbm [resolvable:$true] %s1737
      %1743 = dma.vmem_to_hbm [thread:$0]  %s1736, 256, %s1738, [#allocation4], 128, 128, 8
    $region53: #{transformer_encoder_layer.1} parent=1 // pred_fallthru
      _
    // Predicated region
    $region54: #{transformer_encoder_layer.1} parent=1 // pred_check
      _
    $region55: #{transformer_encoder_layer.1} parent=1 // pred_check_branch
      %1745 = sbr.rel (0) target = $region57
    $region56: #{transformer_encoder_layer.1} parent=1 // pred_region
      %1747 = dma.done [#allocation4], 256
    $region57: #{transformer_encoder_layer.1} parent=1 // pred_fallthru
      _
    %1748 = vsyncpa [#allocation3], 1
    %1749 = vsyncpa [#allocation6], 1
    %1750 = vsyncpa [#allocation9], 1
    %1751 = vsyncpa [#allocation4], 1

</llo_original>
